<compile_context>
chip_gen: v7x
topology: tpu7x:2x2x1
jax: 0.10.0
libtpu: 0.0.40
codegen_flags: <defaults>
</compile_context>

<pallas_src>
import jax
import jax.numpy as jnp
from jax.experimental import pallas as pl
from jax.experimental.pallas import tpu as pltpu

EXPANSION = 4
BN_EPS = 1e-5
LANE = 128
VMEM_LIMIT = 48 * 1024 * 1024   # safe on v5e/v6e (128 MiB) and v7x (64 MiB)


def _rup(x, m):
    return ((x + m - 1) // m) * m


def _tile(dim, pref=512):
    """Largest tile <= pref that divides dim (dims here are multiples of 128)."""
    if dim <= pref:
        return dim
    for t in (512, 384, 256, 128):
        if dim % t == 0:
            return t
    return dim


# ----------------------------------------------------------------------------
# Kernels
# ----------------------------------------------------------------------------
def _matmul_shift_relu_kernel(x_ref, w_ref, t_ref, o_ref, acc_ref):
    """out = relu(x @ w + shift)   (1x1 conv with folded bias/BN + relu)."""
    @pl.when(pl.program_id(2) == 0)
    def _():
        acc_ref[...] = jnp.zeros_like(acc_ref)

    acc_ref[...] += jnp.dot(x_ref[...], w_ref[...],
                            preferred_element_type=jnp.float32)

    @pl.when(pl.program_id(2) == pl.num_programs(2) - 1)
    def _():
        o_ref[...] = jnp.maximum(acc_ref[...] + t_ref[...], 0.0).astype(o_ref.dtype)


def _tail_fused_kernel(x2_ref, w3_ref, t3_ref, xs_ref, wsc_ref, tsc_ref,
                       o_ref, acc_ref):
    """out = relu(relu(x2 @ w3 + t3) + (xs @ wsc + tsc))

    conv3 + bn3 + relu fused with the shortcut projection, the residual add
    and the final relu.  (The module applies relu *before* the add.)
    """
    k = pl.program_id(2)

    @pl.when(k == 0)
    def _():
        acc_ref[...] = jnp.zeros_like(acc_ref)

    acc_ref[...] += jnp.dot(x2_ref[...], w3_ref[...],
                            preferred_element_type=jnp.float32)

    @pl.when(k == pl.num_programs(2) - 1)
    def _():
        y = jnp.maximum(acc_ref[...] + t3_ref[...], 0.0)
        sc = jnp.dot(xs_ref[...], wsc_ref[...],
                     preferred_element_type=jnp.float32) + tsc_ref[...]
        o_ref[...] = jnp.maximum(y + sc, 0.0).astype(o_ref.dtype)


def _conv3x3_shift_relu_kernel(x_ref, w_ref, t_ref, o_ref):
    """3x3, stride 1, pad 1 conv (input pre-padded) + folded bias/BN + relu.

    x_ref: (H+2, W+2, Cin)   w_ref: (3, 3, Cin, Cout)
    t_ref: (1, Cout)         o_ref: (H*W, Cout)
    """
    Hp, Wp, Cin = x_ref.shape
    HW, Cout = o_ref.shape
    W = Wp - 2
    acc = jnp.zeros((HW, Cout), jnp.float32)
    for kx in range(3):
        # One reshape per kx column; the ky row slices below are
        # sublane-aligned (offsets are multiples of W).
        xk = x_ref[:, kx:kx + W, :].reshape(Hp * W, Cin)
        for ky in range(3):
            acc += jnp.dot(xk[ky * W:ky * W + HW, :], w_ref[ky, kx, :, :],
                           preferred_element_type=jnp.float32)
    o_ref[...] = jnp.maximum(acc + t_ref[...], 0.0).astype(o_ref.dtype)


# ----------------------------------------------------------------------------
# Pallas wrappers
# ----------------------------------------------------------------------------
def matmul_shift_relu(x2d, w, t):
    M, K = x2d.shape
    _, Nc = w.shape
    TM = min(512, _rup(M, 8))
    TN = _tile(Nc)
    TK = _tile(K)
    Mp = _rup(M, TM)
    if Mp != M:
        x2d = jnp.pad(x2d, ((0, Mp - M), (0, 0)))
    out = pl.pallas_call(
        _matmul_shift_relu_kernel,
        out_shape=jax.ShapeDtypeStruct((Mp, Nc), x2d.dtype),
        grid=(Mp // TM, Nc // TN, K // TK),
        in_specs=[pl.BlockSpec((TM, TK), lambda i, j, k: (i, k)),
                  pl.BlockSpec((TK, TN), lambda i, j, k: (k, j)),
                  pl.BlockSpec((1, TN), lambda i, j, k: (0, j))],
        out_specs=pl.BlockSpec((TM, TN), lambda i, j, k: (i, j)),
        scratch_shapes=[pltpu.VMEM((TM, TN), jnp.float32)],
        compiler_params=pltpu.CompilerParams(
            dimension_semantics=("parallel", "parallel", "arbitrary"),
            vmem_limit_bytes=VMEM_LIMIT),
    )(x2d, w, t)
    return out[:M] if Mp != M else out


def tail_fused(x2d, w3, t3, xs2d, wsc, tsc):
    M, K = x2d.shape
    _, Nc = w3.shape
    Ks = xs2d.shape[1]
    TM = min(512, _rup(M, 8))
    TN = _tile(Nc)
    TK = _tile(K)
    Mp = _rup(M, TM)
    if Mp != M:
        x2d = jnp.pad(x2d, ((0, Mp - M), (0, 0)))
        xs2d = jnp.pad(xs2d, ((0, Mp - M), (0, 0)))
    # TODO(synk): tile the shortcut K (Ks) as well for very large in_planes.
    out = pl.pallas_call(
        _tail_fused_kernel,
        out_shape=jax.ShapeDtypeStruct((Mp, Nc), x2d.dtype),
        grid=(Mp // TM, Nc // TN, K // TK),
        in_specs=[pl.BlockSpec((TM, TK), lambda i, j, k: (i, k)),    # out2
                  pl.BlockSpec((TK, TN), lambda i, j, k: (k, j)),    # w3
                  pl.BlockSpec((1, TN), lambda i, j, k: (0, j)),     # t3
                  pl.BlockSpec((TM, Ks), lambda i, j, k: (i, 0)),    # xs (shortcut)
                  pl.BlockSpec((Ks, TN), lambda i, j, k: (0, j)),    # wsc
                  pl.BlockSpec((1, TN), lambda i, j, k: (0, j))],    # tsc
        out_specs=pl.BlockSpec((TM, TN), lambda i, j, k: (i, j)),
        scratch_shapes=[pltpu.VMEM((TM, TN), jnp.float32)],
        compiler_params=pltpu.CompilerParams(
            dimension_semantics=("parallel", "parallel", "arbitrary"),
            vmem_limit_bytes=VMEM_LIMIT),
    )(x2d, w3, t3, xs2d, wsc, tsc)
    return out[:M] if Mp != M else out


def conv3x3_shift_relu(x_pad_nhwc, w, t):
    N, Hp, Wp, Cin = x_pad_nhwc.shape
    H, W = Hp - 2, Wp - 2
    Cout = w.shape[-1]
    # TODO(synk): tile over output rows (with halo) for large H*W*Cin so the
    # per-step VMEM stays bounded on v7x (64 MiB).
    return pl.pallas_call(
        _conv3x3_shift_relu_kernel,
        out_shape=jax.ShapeDtypeStruct((N, H * W, Cout), x_pad_nhwc.dtype),
        grid=(N,),
        in_specs=[pl.BlockSpec((None, Hp, Wp, Cin), lambda n: (n, 0, 0, 0)),
                  pl.BlockSpec((3, 3, Cin, Cout), lambda n: (0, 0, 0, 0)),
                  pl.BlockSpec((1, Cout), lambda n: (0, 0))],
        out_specs=pl.BlockSpec((None, H * W, Cout), lambda n: (n, 0, 0)),
        compiler_params=pltpu.CompilerParams(
            dimension_semantics=("parallel",),
            vmem_limit_bytes=VMEM_LIMIT),
    )(x_pad_nhwc, w, t)


# ----------------------------------------------------------------------------
# Parameter preparation: fold conv bias + BN into (weight, shift), lane-pad.
# ----------------------------------------------------------------------------
def _fold_conv_bn(w, b, s, t):
    # (conv_w(x) + b) * s + t  ==  conv_{w*s}(x) + (b*s + t)
    return w * s, b * s + t


def prepare_params(p, in_planes, planes):
    out_c = planes * EXPANSION
    cin_p = _rup(in_planes, LANE)
    pln_p = _rup(planes, LANE)
    out_p = _rup(out_c, LANE)

    def pad2(a, r, c):
        return jnp.pad(a, ((0, r - a.shape[0]), (0, c - a.shape[1])))

    def pad_row(a, c):
        return jnp.pad(a, (0, c - a.shape[0])).reshape(1, c)

    q = {}
    w1, t1 = _fold_conv_bn(p['w1'], p['b1'], p['s1'], p['t1'])
    q['w1'], q['t1'] = pad2(w1, cin_p, pln_p), pad_row(t1, pln_p)

    w2, t2 = _fold_conv_bn(p['w2'], p['b2'], p['s2'], p['t2'])
    q['w2'] = jnp.pad(w2, ((0, 0), (0, 0),
                           (0, pln_p - planes), (0, pln_p - planes)))
    q['t2'] = pad_row(t2, pln_p)

    w3, t3 = _fold_conv_bn(p['w3'], p['b3'], p['s3'], p['t3'])
    q['w3'], q['t3'] = pad2(w3, pln_p, out_p), pad_row(t3, out_p)

    if 'wsc' in p:
        wsc, tsc = _fold_conv_bn(p['wsc'], p['bsc'], p['ssc'], p['tsc'])
    else:
        # Identity shortcut expressed as an identity projection (per the
        # module it is only shape-valid when in_planes == planes*EXPANSION).
        wsc = jnp.eye(in_planes, out_c, dtype=jnp.float32)
        tsc = jnp.zeros((out_c,), jnp.float32)
    q['wsc'], q['tsc'] = pad2(wsc, cin_p, out_p), pad_row(tsc, out_p)

    meta = dict(cin_p=cin_p, pln_p=pln_p, out_p=out_p, out_c=out_c)
    return q, meta


# ----------------------------------------------------------------------------
# Bottleneck forward
# ----------------------------------------------------------------------------
def bottleneck_forward(x_nchw, q, meta, stride):
    N, Cin, H, W = x_nchw.shape
    cin_p, pln_p, out_p, out_c = (meta['cin_p'], meta['pln_p'],
                                  meta['out_p'], meta['out_c'])

    # NCHW -> NHWC, stride-select the 1x1-conv input pixels, lane-pad channels.
    # TODO(synk): fold stride/layout selection into the conv1 BlockSpec
    # index_map to remove this extra XLA pass for very large activations.
    xs = jnp.transpose(x_nchw, (0, 2, 3, 1))[:, ::stride, ::stride, :]
    Ho, Wo = xs.shape[1], xs.shape[2]
    xs = jnp.pad(xs, ((0, 0), (0, 0), (0, 0), (0, cin_p - Cin)))
    M = N * Ho * Wo
    xs2d = xs.reshape(M, cin_p)

    # conv1 (1x1, stride) + bn1 + relu
    out1 = matmul_shift_relu(xs2d, q['w1'], q['t1'])                 # (M, pln_p)

    # conv2 (3x3, stride 1, pad 1) + bn2 + relu
    # TODO(synk): replace jnp.pad halo with in-kernel edge masking.
    out1_pad = jnp.pad(out1.reshape(N, Ho, Wo, pln_p),
                       ((0, 0), (1, 1), (1, 1), (0, 0)))
    out2 = conv3x3_shift_relu(out1_pad, q['w2'], q['t2'])            # (N, Ho*Wo, pln_p)
    out2_2d = out2.reshape(M, pln_p)

    # conv3 (1x1) + bn3 + relu, fused with shortcut projection, add, final relu
    out3 = tail_fused(out2_2d, q['w3'], q['t3'], xs2d, q['wsc'], q['tsc'])

    out = out3.reshape(N, Ho, Wo, out_p)[..., :out_c]
    return jnp.transpose(out, (0, 3, 1, 2))                          # NHWC -> NCHW


# ----------------------------------------------------------------------------
# Deterministic parameter init (matches nn.Module shapes; BN eval-mode folded)
# ----------------------------------------------------------------------------
def _fold_bn(gamma, beta, mean, var):
    scale = gamma / jnp.sqrt(var + BN_EPS)
    shift = beta - mean * scale
    return scale, shift


def init_params(key, in_planes, planes, stride):
    keys = jax.random.split(key, 24)
    k = iter(keys)

    def conv_w(shape):
        return 0.1 * jax.random.normal(next(k), shape, jnp.float32)

    def conv_b(c):
        return 0.1 * jax.random.normal(next(k), (c,), jnp.float32)

    def bn(c):
        gamma = jax.random.uniform(next(k), (c,), jnp.float32, 0.5, 1.5)
        beta = 0.1 * jax.random.normal(next(k), (c,), jnp.float32)
        mean = 0.1 * jax.random.normal(next(k), (c,), jnp.float32)
        var = jax.random.uniform(next(k), (c,), jnp.float32, 0.5, 1.5)
        return _fold_bn(gamma, beta, mean, var)

    out_planes = planes * EXPANSION
    p = {}
    p['w1'], p['b1'] = conv_w((in_planes, planes)), conv_b(planes)        # 1x1
    p['s1'], p['t1'] = bn(planes)
    p['w2'], p['b2'] = conv_w((3, 3, planes, planes)), conv_b(planes)     # 3x3 HWIO
    p['s2'], p['t2'] = bn(planes)
    p['w3'], p['b3'] = conv_w((planes, out_planes)), conv_b(out_planes)   # 1x1
    p['s3'], p['t3'] = bn(out_planes)
    if stride != 1 or planes != in_planes * EXPANSION:   # condition as written in the module
        p['wsc'], p['bsc'] = conv_w((in_planes, out_planes)), conv_b(out_planes)
        p['ssc'], p['tsc'] = bn(out_planes)
    return p


# ----------------------------------------------------------------------------
# Pure-JAX reference (for verification)
# ----------------------------------------------------------------------------
def ref_bottleneck(x_nchw, p, stride):
    x = jnp.transpose(x_nchw, (0, 2, 3, 1))
    dn = ('NHWC', 'HWIO', 'NHWC')

    def conv(v, w, b, strides, padding):
        y = jax.lax.conv_general_dilated(v, w, strides, padding,
                                         dimension_numbers=dn)
        return y + b

    o = conv(x, p['w1'].reshape(1, 1, *p['w1'].shape), p['b1'],
             (stride, stride), 'VALID')
    o = jax.nn.relu(o * p['s1'] + p['t1'])
    o = conv(o, p['w2'], p['b2'], (1, 1), ((1, 1), (1, 1)))
    o = jax.nn.relu(o * p['s2'] + p['t2'])
    o = conv(o, p['w3'].reshape(1, 1, *p['w3'].shape), p['b3'], (1, 1), 'VALID')
    o = jax.nn.relu(o * p['s3'] + p['t3'])
    if 'wsc' in p:
        sc = conv(x, p['wsc'].reshape(1, 1, *p['wsc'].shape), p['bsc'],
                  (stride, stride), 'VALID')
        sc = sc * p['ssc'] + p['tsc']
    else:
        sc = x[:, ::stride, ::stride, :]
    o = jax.nn.relu(o + sc)
    return jnp.transpose(o, (0, 3, 1, 2))


if __name__ == "__main__":
    in_planes, planes, stride = 4, 4, 2
    N, H, W = 2, 16, 16

    key = jax.random.PRNGKey(0)
    kx, kp = jax.random.split(key)
    x = jax.random.normal(kx, (N, in_planes, H, W), jnp.float32)   # NCHW like PyTorch
    raw_params = init_params(kp, in_planes, planes, stride)
    q, meta = prepare_params(raw_params, in_planes, planes)

    fwd = jax.jit(lambda v: bottleneck_forward(v, q, meta, stride))
    out = jax.block_until_ready(fwd(x))

    expected = jax.block_until_ready(ref_bottleneck(x, raw_params, stride))
    assert out.shape == (N, planes * EXPANSION, H // stride, W // stride), out.shape
    err = float(jnp.max(jnp.abs(out - expected)))
    assert jnp.allclose(out, expected, atol=1e-4, rtol=1e-4), err

    print("KERNEL_OK")
</pallas_src>

<mosaic_0001>
module attributes {stable_mosaic.version = 11 : i64} {
  func.func @_matmul_shift_relu_kernel(%arg0: i32, %arg1: i32, %arg2: i32, %arg3: memref<128x128xf32, #tpu.memory_space<vmem>>, %arg4: memref<128x128xf32, #tpu.memory_space<vmem>>, %arg5: memref<1x128xf32, #tpu.memory_space<vmem>>, %arg6: memref<128x128xf32, #tpu.memory_space<vmem>>, %arg7: memref<128x128xf32, #tpu.memory_space<vmem>>) attributes {dimension_semantics = [#tpu.dimension_semantics<parallel>, #tpu.dimension_semantics<parallel>, #tpu.dimension_semantics<arbitrary>], iteration_bounds = array<i64: 1, 1, 1>, scalar_prefetch = 0 : i64, scratch_operands = 1 : i64, tpu.core_type = #tpu.core_type<tc>, window_params = [{transform_indices = @transform_0, window_bounds = array<i64: 128, 128>}, {transform_indices = @transform_1, window_bounds = array<i64: 128, 128>}, {transform_indices = @transform_2, window_bounds = array<i64: 1, 128>}, {transform_indices = @transform_3, window_bounds = array<i64: 128, 128>}]} {
    %c0_i32 = arith.constant 0 : i32
    %0 = arith.cmpi eq, %arg2, %c0_i32 : i32
    %1 = arith.extui %0 : i1 to i32
    %c0_i32_0 = arith.constant 0 : i32
    %2 = arith.cmpi ne, %1, %c0_i32_0 : i32
    scf.if %2 {
      %cst_10 = arith.constant 0.000000e+00 : f32
      %12 = vector.broadcast %cst_10 : f32 to vector<128x128xf32>
      %c0_11 = arith.constant 0 : index
      %c0_12 = arith.constant 0 : index
      %13 = vector.load %arg7[%c0_11, %c0_12] : memref<128x128xf32, #tpu.memory_space<vmem>>, vector<128x128xf32>
      tpu.vector_store %arg7[%c0_11, %c0_12], %12 {strides = array<i32>} : memref<128x128xf32, #tpu.memory_space<vmem>>, vector<128x128xf32>,
    } else {
    }
    %c0 = arith.constant 0 : index
    %c0_1 = arith.constant 0 : index
    %3 = vector.load %arg7[%c0, %c0_1] : memref<128x128xf32, #tpu.memory_space<vmem>>, vector<128x128xf32>
    %c0_2 = arith.constant 0 : index
    %c0_3 = arith.constant 0 : index
    %4 = vector.load %arg3[%c0_2, %c0_3] : memref<128x128xf32, #tpu.memory_space<vmem>>, vector<128x128xf32>
    %c0_4 = arith.constant 0 : index
    %c0_5 = arith.constant 0 : index
    %5 = vector.load %arg4[%c0_4, %c0_5] : memref<128x128xf32, #tpu.memory_space<vmem>>, vector<128x128xf32>
    %cst = arith.constant dense<0.000000e+00> : vector<128x128xf32>
    %6 = tpu.matmul %4, %5, %cst {dimension_numbers = #tpu.dot_dimension_numbers<[1], [0], [0], [1], [0, 0, 1, 1], [], []>} : vector<128x128xf32>, vector<128x128xf32>, vector<128x128xf32> -> vector<128x128xf32>
    %7 = arith.addf %3, %6 : vector<128x128xf32>
    %c0_6 = arith.constant 0 : index
    %c0_7 = arith.constant 0 : index
    %8 = vector.load %arg7[%c0_6, %c0_7] : memref<128x128xf32, #tpu.memory_space<vmem>>, vector<128x128xf32>
    tpu.vector_store %arg7[%c0_6, %c0_7], %7 {strides = array<i32>} : memref<128x128xf32, #tpu.memory_space<vmem>>, vector<128x128xf32>,
    %c0_i32_8 = arith.constant 0 : i32
    %9 = arith.cmpi eq, %arg2, %c0_i32_8 : i32
    %10 = arith.extui %9 : i1 to i32
    %c0_i32_9 = arith.constant 0 : i32
    %11 = arith.cmpi ne, %10, %c0_i32_9 : i32
    scf.if %11 {
      %c0_10 = arith.constant 0 : index
      %c0_11 = arith.constant 0 : index
      %12 = vector.load %arg7[%c0_10, %c0_11] : memref<128x128xf32, #tpu.memory_space<vmem>>, vector<128x128xf32>
      %c0_12 = arith.constant 0 : index
      %c0_13 = arith.constant 0 : index
      %13 = vector.load %arg5[%c0_12, %c0_13] : memref<1x128xf32, #tpu.memory_space<vmem>>, vector<1x128xf32>
      %14 = vector.broadcast %13 : vector<1x128xf32> to vector<128x128xf32>
      %15 = arith.addf %12, %14 : vector<128x128xf32>
      %cst_14 = arith.constant 0.000000e+00 : f32
      %16 = vector.broadcast %cst_14 : f32 to vector<128x128xf32>
      %17 = arith.maximumf %15, %16 : vector<128x128xf32>
      %c0_15 = arith.constant 0 : index
      %c0_16 = arith.constant 0 : index
      %18 = vector.load %arg6[%c0_15, %c0_16] : memref<128x128xf32, #tpu.memory_space<vmem>>, vector<128x128xf32>
      tpu.vector_store %arg6[%c0_15, %c0_16], %17 {strides = array<i32>} : memref<128x128xf32, #tpu.memory_space<vmem>>, vector<128x128xf32>,
    } else {
    }
    return
  }
  func.func @transform_0(%arg0: i32, %arg1: i32, %arg2: i32) -> (i32, i32) {
    %c0_i32 = arith.constant 0 : i32
    return %arg0, %arg2 : i32, i32
  }
  func.func @transform_1(%arg0: i32, %arg1: i32, %arg2: i32) -> (i32, i32) {
    %c0_i32 = arith.constant 0 : i32
    return %arg2, %arg1 : i32, i32
  }
  func.func @transform_2(%arg0: i32, %arg1: i32, %arg2: i32) -> (i32, i32) {
    %c0_i32 = arith.constant 0 : i32
    %c0_i32_0 = arith.constant 0 : i32
    return %c0_i32, %arg1 : i32, i32
  }
  func.func @transform_3(%arg0: i32, %arg1: i32, %arg2: i32) -> (i32, i32) {
    %c0_i32 = arith.constant 0 : i32
    return %arg0, %arg1 : i32, i32
  }
}

module attributes {stable_mosaic.version = 11 : i64} {
  func.func @_tail_fused_kernel(%arg0: i32, %arg1: i32, %arg2: i32, %arg3: memref<128x128xf32, #tpu.memory_space<vmem>>, %arg4: memref<128x128xf32, #tpu.memory_space<vmem>>, %arg5: memref<1x128xf32, #tpu.memory_space<vmem>>, %arg6: memref<128x128xf32, #tpu.memory_space<vmem>>, %arg7: memref<128x128xf32, #tpu.memory_space<vmem>>, %arg8: memref<1x128xf32, #tpu.memory_space<vmem>>, %arg9: memref<128x128xf32, #tpu.memory_space<vmem>>, %arg10: memref<128x128xf32, #tpu.memory_space<vmem>>) attributes {dimension_semantics = [#tpu.dimension_semantics<parallel>, #tpu.dimension_semantics<parallel>, #tpu.dimension_semantics<arbitrary>], iteration_bounds = array<i64: 1, 1, 1>, scalar_prefetch = 0 : i64, scratch_operands = 1 : i64, tpu.core_type = #tpu.core_type<tc>, window_params = [{transform_indices = @transform_0, window_bounds = array<i64: 128, 128>}, {transform_indices = @transform_1, window_bounds = array<i64: 128, 128>}, {transform_indices = @transform_2, window_bounds = array<i64: 1, 128>}, {transform_indices = @transform_3, window_bounds = array<i64: 128, 128>}, {transform_indices = @transform_4, window_bounds = array<i64: 128, 128>}, {transform_indices = @transform_5, window_bounds = array<i64: 1, 128>}, {transform_indices = @transform_6, window_bounds = array<i64: 128, 128>}]} {
    %c0_i32 = arith.constant 0 : i32
    %0 = arith.cmpi eq, %arg2, %c0_i32 : i32
    %1 = arith.extui %0 : i1 to i32
    %c0_i32_0 = arith.constant 0 : i32
    %2 = arith.cmpi ne, %1, %c0_i32_0 : i32
    scf.if %2 {
      %cst_10 = arith.constant 0.000000e+00 : f32
      %12 = vector.broadcast %cst_10 : f32 to vector<128x128xf32>
      %c0_11 = arith.constant 0 : index
      %c0_12 = arith.constant 0 : index
      %13 = vector.load %arg10[%c0_11, %c0_12] : memref<128x128xf32, #tpu.memory_space<vmem>>, vector<128x128xf32>
      tpu.vector_store %arg10[%c0_11, %c0_12], %12 {strides = array<i32>} : memref<128x128xf32, #tpu.memory_space<vmem>>, vector<128x128xf32>,
    } else {
    }
    %c0 = arith.constant 0 : index
    %c0_1 = arith.constant 0 : index
    %3 = vector.load %arg10[%c0, %c0_1] : memref<128x128xf32, #tpu.memory_space<vmem>>, vector<128x128xf32>
    %c0_2 = arith.constant 0 : index
    %c0_3 = arith.constant 0 : index
    %4 = vector.load %arg3[%c0_2, %c0_3] : memref<128x128xf32, #tpu.memory_space<vmem>>, vector<128x128xf32>
    %c0_4 = arith.constant 0 : index
    %c0_5 = arith.constant 0 : index
    %5 = vector.load %arg4[%c0_4, %c0_5] : memref<128x128xf32, #tpu.memory_space<vmem>>, vector<128x128xf32>
    %cst = arith.constant dense<0.000000e+00> : vector<128x128xf32>
    %6 = tpu.matmul %4, %5, %cst {dimension_numbers = #tpu.dot_dimension_numbers<[1], [0], [0], [1], [0, 0, 1, 1], [], []>} : vector<128x128xf32>, vector<128x128xf32>, vector<128x128xf32> -> vector<128x128xf32>
    %7 = arith.addf %3, %6 : vector<128x128xf32>
    %c0_6 = arith.constant 0 : index
    %c0_7 = arith.constant 0 : index
    %8 = vector.load %arg10[%c0_6, %c0_7] : memref<128x128xf32, #tpu.memory_space<vmem>>, vector<128x128xf32>
    tpu.vector_store %arg10[%c0_6, %c0_7], %7 {strides = array<i32>} : memref<128x128xf32, #tpu.memory_space<vmem>>, vector<128x128xf32>,
    %c0_i32_8 = arith.constant 0 : i32
    %9 = arith.cmpi eq, %arg2, %c0_i32_8 : i32
    %10 = arith.extui %9 : i1 to i32
    %c0_i32_9 = arith.constant 0 : i32
    %11 = arith.cmpi ne, %10, %c0_i32_9 : i32
    scf.if %11 {
      %c0_10 = arith.constant 0 : index
      %c0_11 = arith.constant 0 : index
      %12 = vector.load %arg10[%c0_10, %c0_11] : memref<128x128xf32, #tpu.memory_space<vmem>>, vector<128x128xf32>
      %c0_12 = arith.constant 0 : index
      %c0_13 = arith.constant 0 : index
      %13 = vector.load %arg5[%c0_12, %c0_13] : memref<1x128xf32, #tpu.memory_space<vmem>>, vector<1x128xf32>
      %14 = vector.broadcast %13 : vector<1x128xf32> to vector<128x128xf32>
      %15 = arith.addf %12, %14 : vector<128x128xf32>
      %cst_14 = arith.constant 0.000000e+00 : f32
      %16 = vector.broadcast %cst_14 : f32 to vector<128x128xf32>
      %17 = arith.maximumf %15, %16 : vector<128x128xf32>
      %c0_15 = arith.constant 0 : index
      %c0_16 = arith.constant 0 : index
      %18 = vector.load %arg6[%c0_15, %c0_16] : memref<128x128xf32, #tpu.memory_space<vmem>>, vector<128x128xf32>
      %c0_17 = arith.constant 0 : index
      %c0_18 = arith.constant 0 : index
      %19 = vector.load %arg7[%c0_17, %c0_18] : memref<128x128xf32, #tpu.memory_space<vmem>>, vector<128x128xf32>
      %cst_19 = arith.constant dense<0.000000e+00> : vector<128x128xf32>
      %20 = tpu.matmul %18, %19, %cst_19 {dimension_numbers = #tpu.dot_dimension_numbers<[1], [0], [0], [1], [0, 0, 1, 1], [], []>} : vector<128x128xf32>, vector<128x128xf32>, vector<128x128xf32> -> vector<128x128xf32>
      %c0_20 = arith.constant 0 : index
      %c0_21 = arith.constant 0 : index
      %21 = vector.load %arg8[%c0_20, %c0_21] : memref<1x128xf32, #tpu.memory_space<vmem>>, vector<1x128xf32>
      %22 = vector.broadcast %21 : vector<1x128xf32> to vector<128x128xf32>
      %23 = arith.addf %20, %22 : vector<128x128xf32>
      %24 = arith.addf %17, %23 : vector<128x128xf32>
      %cst_22 = arith.constant 0.000000e+00 : f32
      %25 = vector.broadcast %cst_22 : f32 to vector<128x128xf32>
      %26 = arith.maximumf %24, %25 : vector<128x128xf32>
      %c0_23 = arith.constant 0 : index
      %c0_24 = arith.constant 0 : index
      %27 = vector.load %arg9[%c0_23, %c0_24] : memref<128x128xf32, #tpu.memory_space<vmem>>, vector<128x128xf32>
      tpu.vector_store %arg9[%c0_23, %c0_24], %26 {strides = array<i32>} : memref<128x128xf32, #tpu.memory_space<vmem>>, vector<128x128xf32>,
    } else {
    }
    return
  }
  func.func @transform_0(%arg0: i32, %arg1: i32, %arg2: i32) -> (i32, i32) {
    %c0_i32 = arith.constant 0 : i32
    return %arg0, %arg2 : i32, i32
  }
  func.func @transform_1(%arg0: i32, %arg1: i32, %arg2: i32) -> (i32, i32) {
    %c0_i32 = arith.constant 0 : i32
    return %arg2, %arg1 : i32, i32
  }
  func.func @transform_2(%arg0: i32, %arg1: i32, %arg2: i32) -> (i32, i32) {
    %c0_i32 = arith.constant 0 : i32
    %c0_i32_0 = arith.constant 0 : i32
    return %c0_i32, %arg1 : i32, i32
  }
  func.func @transform_3(%arg0: i32, %arg1: i32, %arg2: i32) -> (i32, i32) {
    %c0_i32 = arith.constant 0 : i32
    %c0_i32_0 = arith.constant 0 : i32
    return %arg0, %c0_i32 : i32, i32
  }
  func.func @transform_4(%arg0: i32, %arg1: i32, %arg2: i32) -> (i32, i32) {
    %c0_i32 = arith.constant 0 : i32
    %c0_i32_0 = arith.constant 0 : i32
    return %c0_i32, %arg1 : i32, i32
  }
  func.func @transform_5(%arg0: i32, %arg1: i32, %arg2: i32) -> (i32, i32) {
    %c0_i32 = arith.constant 0 : i32
    %c0_i32_0 = arith.constant 0 : i32
    return %c0_i32, %arg1 : i32, i32
  }
  func.func @transform_6(%arg0: i32, %arg1: i32, %arg2: i32) -> (i32, i32) {
    %c0_i32 = arith.constant 0 : i32
    return %arg0, %arg1 : i32, i32
  }
}

module attributes {stable_mosaic.version = 11 : i64} {
  func.func @_conv3x3_shift_relu_kernel(%arg0: i32, %arg1: memref<1x10x10x128xf32, #tpu.memory_space<vmem>>, %arg2: memref<3x3x128x128xf32, #tpu.memory_space<vmem>>, %arg3: memref<1x128xf32, #tpu.memory_space<vmem>>, %arg4: memref<1x64x128xf32, #tpu.memory_space<vmem>>) attributes {dimension_semantics = [#tpu.dimension_semantics<parallel>], iteration_bounds = array<i64: 2>, scalar_prefetch = 0 : i64, scratch_operands = 0 : i64, tpu.core_type = #tpu.core_type<tc>, window_params = [{transform_indices = @transform_0, window_bounds = array<i64: 1, 10, 10, 128>}, {pipeline_mode = #tpu.pipeline_mode<synchronous>, transform_indices = @transform_1, window_bounds = array<i64: 3, 3, 128, 128>}, {pipeline_mode = #tpu.pipeline_mode<synchronous>, transform_indices = @transform_2, window_bounds = array<i64: 1, 128>}, {transform_indices = @transform_3, window_bounds = array<i64: 1, 64, 128>}]} {
    %cst = arith.constant 0.000000e+00 : f32
    %0 = vector.broadcast %cst : f32 to vector<64x128xf32>
    %c0 = arith.constant 0 : index
    %c0_0 = arith.constant 0 : index
    %c0_1 = arith.constant 0 : index
    %c0_2 = arith.constant 0 : index
    %1 = vector.load %arg1[%c0, %c0_0, %c0_1, %c0_2] : memref<1x10x10x128xf32, #tpu.memory_space<vmem>>, vector<1x10x8x128xf32>
    %2 = vector.shape_cast %1 : vector<1x10x8x128xf32> to vector<10x8x128xf32>
    %3 = vector.shape_cast %2 : vector<10x8x128xf32> to vector<80x128xf32>
    %4 = vector.extract_strided_slice %3 {offsets = [0, 0], sizes = [64, 128], strides = [1, 1]} : vector<80x128xf32> to vector<64x128xf32>
    %c0_3 = arith.constant 0 : index
    %c0_4 = arith.constant 0 : index
    %c0_5 = arith.constant 0 : index
    %c0_6 = arith.constant 0 : index
    %5 = vector.load %arg2[%c0_3, %c0_4, %c0_5, %c0_6] : memref<3x3x128x128xf32, #tpu.memory_space<vmem>>, vector<1x1x128x128xf32>
    %6 = vector.shape_cast %5 : vector<1x1x128x128xf32> to vector<128x128xf32>
    %cst_7 = arith.constant dense<0.000000e+00> : vector<64x128xf32>
    %7 = tpu.matmul %4, %6, %cst_7 {dimension_numbers = #tpu.dot_dimension_numbers<[1], [0], [0], [1], [0, 0, 1, 1], [], []>} : vector<64x128xf32>, vector<128x128xf32>, vector<64x128xf32> -> vector<64x128xf32>
    %8 = arith.addf %0, %7 : vector<64x128xf32>
    %9 = vector.extract_strided_slice %3 {offsets = [8, 0], sizes = [64, 128], strides = [1, 1]} : vector<80x128xf32> to vector<64x128xf32>
    %c1 = arith.constant 1 : index
    %c0_8 = arith.constant 0 : index
    %c0_9 = arith.constant 0 : index
    %c0_10 = arith.constant 0 : index
    %10 = vector.load %arg2[%c1, %c0_8, %c0_9, %c0_10] : memref<3x3x128x128xf32, #tpu.memory_space<vmem>>, vector<1x1x128x128xf32>
    %11 = vector.shape_cast %10 : vector<1x1x128x128xf32> to vector<128x128xf32>
    %cst_11 = arith.constant dense<0.000000e+00> : vector<64x128xf32>
    %12 = tpu.matmul %9, %11, %cst_11 {dimension_numbers = #tpu.dot_dimension_numbers<[1], [0], [0], [1], [0, 0, 1, 1], [], []>} : vector<64x128xf32>, vector<128x128xf32>, vector<64x128xf32> -> vector<64x128xf32>
    %13 = arith.addf %8, %12 : vector<64x128xf32>
    %14 = vector.extract_strided_slice %3 {offsets = [16, 0], sizes = [64, 128], strides = [1, 1]} : vector<80x128xf32> to vector<64x128xf32>
    %c2 = arith.constant 2 : index
    %c0_12 = arith.constant 0 : index
    %c0_13 = arith.constant 0 : index
    %c0_14 = arith.constant 0 : index
    %15 = vector.load %arg2[%c2, %c0_12, %c0_13, %c0_14] : memref<3x3x128x128xf32, #tpu.memory_space<vmem>>, vector<1x1x128x128xf32>
    %16 = vector.shape_cast %15 : vector<1x1x128x128xf32> to vector<128x128xf32>
    %cst_15 = arith.constant dense<0.000000e+00> : vector<64x128xf32>
    %17 = tpu.matmul %14, %16, %cst_15 {dimension_numbers = #tpu.dot_dimension_numbers<[1], [0], [0], [1], [0, 0, 1, 1], [], []>} : vector<64x128xf32>, vector<128x128xf32>, vector<64x128xf32> -> vector<64x128xf32>
    %18 = arith.addf %13, %17 : vector<64x128xf32>
    %c0_16 = arith.constant 0 : index
    %c0_17 = arith.constant 0 : index
    %c1_18 = arith.constant 1 : index
    %c0_19 = arith.constant 0 : index
    %19 = vector.load %arg1[%c0_16, %c0_17, %c1_18, %c0_19] : memref<1x10x10x128xf32, #tpu.memory_space<vmem>>, vector<1x10x8x128xf32>
    %20 = vector.shape_cast %19 : vector<1x10x8x128xf32> to vector<10x8x128xf32>
    %21 = vector.shape_cast %20 : vector<10x8x128xf32> to vector<80x128xf32>
    %22 = vector.extract_strided_slice %21 {offsets = [0, 0], sizes = [64, 128], strides = [1, 1]} : vector<80x128xf32> to vector<64x128xf32>
    %c0_20 = arith.constant 0 : index
    %c1_21 = arith.constant 1 : index
    %c0_22 = arith.constant 0 : index
    %c0_23 = arith.constant 0 : index
    %23 = vector.load %arg2[%c0_20, %c1_21, %c0_22, %c0_23] : memref<3x3x128x128xf32, #tpu.memory_space<vmem>>, vector<1x1x128x128xf32>
    %24 = vector.shape_cast %23 : vector<1x1x128x128xf32> to vector<128x128xf32>
    %cst_24 = arith.constant dense<0.000000e+00> : vector<64x128xf32>
    %25 = tpu.matmul %22, %24, %cst_24 {dimension_numbers = #tpu.dot_dimension_numbers<[1], [0], [0], [1], [0, 0, 1, 1], [], []>} : vector<64x128xf32>, vector<128x128xf32>, vector<64x128xf32> -> vector<64x128xf32>
    %26 = arith.addf %18, %25 : vector<64x128xf32>
    %27 = vector.extract_strided_slice %21 {offsets = [8, 0], sizes = [64, 128], strides = [1, 1]} : vector<80x128xf32> to vector<64x128xf32>
    %c1_25 = arith.constant 1 : index
    %c1_26 = arith.constant 1 : index
    %c0_27 = arith.constant 0 : index
    %c0_28 = arith.constant 0 : index
    %28 = vector.load %arg2[%c1_25, %c1_26, %c0_27, %c0_28] : memref<3x3x128x128xf32, #tpu.memory_space<vmem>>, vector<1x1x128x128xf32>
    %29 = vector.shape_cast %28 : vector<1x1x128x128xf32> to vector<128x128xf32>
    %cst_29 = arith.constant dense<0.000000e+00> : vector<64x128xf32>
    %30 = tpu.matmul %27, %29, %cst_29 {dimension_numbers = #tpu.dot_dimension_numbers<[1], [0], [0], [1], [0, 0, 1, 1], [], []>} : vector<64x128xf32>, vector<128x128xf32>, vector<64x128xf32> -> vector<64x128xf32>
    %31 = arith.addf %26, %30 : vector<64x128xf32>
    %32 = vector.extract_strided_slice %21 {offsets = [16, 0], sizes = [64, 128], strides = [1, 1]} : vector<80x128xf32> to vector<64x128xf32>
    %c2_30 = arith.constant 2 : index
    %c1_31 = arith.constant 1 : index
    %c0_32 = arith.constant 0 : index
    %c0_33 = arith.constant 0 : index
    %33 = vector.load %arg2[%c2_30, %c1_31, %c0_32, %c0_33] : memref<3x3x128x128xf32, #tpu.memory_space<vmem>>, vector<1x1x128x128xf32>
    %34 = vector.shape_cast %33 : vector<1x1x128x128xf32> to vector<128x128xf32>
    %cst_34 = arith.constant dense<0.000000e+00> : vector<64x128xf32>
    %35 = tpu.matmul %32, %34, %cst_34 {dimension_numbers = #tpu.dot_dimension_numbers<[1], [0], [0], [1], [0, 0, 1, 1], [], []>} : vector<64x128xf32>, vector<128x128xf32>, vector<64x128xf32> -> vector<64x128xf32>
    %36 = arith.addf %31, %35 : vector<64x128xf32>
    %c0_35 = arith.constant 0 : index
    %c0_36 = arith.constant 0 : index
    %c2_37 = arith.constant 2 : index
    %c0_38 = arith.constant 0 : index
    %37 = vector.load %arg1[%c0_35, %c0_36, %c2_37, %c0_38] : memref<1x10x10x128xf32, #tpu.memory_space<vmem>>, vector<1x10x8x128xf32>
    %38 = vector.shape_cast %37 : vector<1x10x8x128xf32> to vector<10x8x128xf32>
    %39 = vector.shape_cast %38 : vector<10x8x128xf32> to vector<80x128xf32>
    %40 = vector.extract_strided_slice %39 {offsets = [0, 0], sizes = [64, 128], strides = [1, 1]} : vector<80x128xf32> to vector<64x128xf32>
    %c0_39 = arith.constant 0 : index
    %c2_40 = arith.constant 2 : index
    %c0_41 = arith.constant 0 : index
    %c0_42 = arith.constant 0 : index
    %41 = vector.load %arg2[%c0_39, %c2_40, %c0_41, %c0_42] : memref<3x3x128x128xf32, #tpu.memory_space<vmem>>, vector<1x1x128x128xf32>
    %42 = vector.shape_cast %41 : vector<1x1x128x128xf32> to vector<128x128xf32>
    %cst_43 = arith.constant dense<0.000000e+00> : vector<64x128xf32>
    %43 = tpu.matmul %40, %42, %cst_43 {dimension_numbers = #tpu.dot_dimension_numbers<[1], [0], [0], [1], [0, 0, 1, 1], [], []>} : vector<64x128xf32>, vector<128x128xf32>, vector<64x128xf32> -> vector<64x128xf32>
    %44 = arith.addf %36, %43 : vector<64x128xf32>
    %45 = vector.extract_strided_slice %39 {offsets = [8, 0], sizes = [64, 128], strides = [1, 1]} : vector<80x128xf32> to vector<64x128xf32>
    %c1_44 = arith.constant 1 : index
    %c2_45 = arith.constant 2 : index
    %c0_46 = arith.constant 0 : index
    %c0_47 = arith.constant 0 : index
    %46 = vector.load %arg2[%c1_44, %c2_45, %c0_46, %c0_47] : memref<3x3x128x128xf32, #tpu.memory_space<vmem>>, vector<1x1x128x128xf32>
    %47 = vector.shape_cast %46 : vector<1x1x128x128xf32> to vector<128x128xf32>
    %cst_48 = arith.constant dense<0.000000e+00> : vector<64x128xf32>
    %48 = tpu.matmul %45, %47, %cst_48 {dimension_numbers = #tpu.dot_dimension_numbers<[1], [0], [0], [1], [0, 0, 1, 1], [], []>} : vector<64x128xf32>, vector<128x128xf32>, vector<64x128xf32> -> vector<64x128xf32>
    %49 = arith.addf %44, %48 : vector<64x128xf32>
    %50 = vector.extract_strided_slice %39 {offsets = [16, 0], sizes = [64, 128], strides = [1, 1]} : vector<80x128xf32> to vector<64x128xf32>
    %c2_49 = arith.constant 2 : index
    %c2_50 = arith.constant 2 : index
    %c0_51 = arith.constant 0 : index
    %c0_52 = arith.constant 0 : index
    %51 = vector.load %arg2[%c2_49, %c2_50, %c0_51, %c0_52] : memref<3x3x128x128xf32, #tpu.memory_space<vmem>>, vector<1x1x128x128xf32>
    %52 = vector.shape_cast %51 : vector<1x1x128x128xf32> to vector<128x128xf32>
    %cst_53 = arith.constant dense<0.000000e+00> : vector<64x128xf32>
    %53 = tpu.matmul %50, %52, %cst_53 {dimension_numbers = #tpu.dot_dimension_numbers<[1], [0], [0], [1], [0, 0, 1, 1], [], []>} : vector<64x128xf32>, vector<128x128xf32>, vector<64x128xf32> -> vector<64x128xf32>
    %54 = arith.addf %49, %53 : vector<64x128xf32>
    %c0_54 = arith.constant 0 : index
    %c0_55 = arith.constant 0 : index
    %55 = vector.load %arg3[%c0_54, %c0_55] : memref<1x128xf32, #tpu.memory_space<vmem>>, vector<1x128xf32>
    %56 = vector.broadcast %55 : vector<1x128xf32> to vector<64x128xf32>
    %57 = arith.addf %54, %56 : vector<64x128xf32>
    %cst_56 = arith.constant 0.000000e+00 : f32
    %58 = vector.broadcast %cst_56 : f32 to vector<64x128xf32>
    %59 = arith.maximumf %57, %58 : vector<64x128xf32>
    %c0_57 = arith.constant 0 : index
    %c0_58 = arith.constant 0 : index
    %c0_59 = arith.constant 0 : index
    %60 = vector.load %arg4[%c0_57, %c0_58, %c0_59] : memref<1x64x128xf32, #tpu.memory_space<vmem>>, vector<1x64x128xf32>
    %61 = vector.shape_cast %60 : vector<1x64x128xf32> to vector<64x128xf32>
    %62 = vector.shape_cast %59 : vector<64x128xf32> to vector<1x64x128xf32>
    tpu.vector_store %arg4[%c0_57, %c0_58, %c0_59], %62 {strides = array<i32>} : memref<1x64x128xf32, #tpu.memory_space<vmem>>, vector<1x64x128xf32>,
    return
  }
  func.func @transform_0(%arg0: i32) -> (i32, i32, i32, i32) {
    %c0_i32 = arith.constant 0 : i32
    %c0_i32_0 = arith.constant 0 : i32
    %c0_i32_1 = arith.constant 0 : i32
    %c0_i32_2 = arith.constant 0 : i32
    return %arg0, %c0_i32, %c0_i32_0, %c0_i32_1 : i32, i32, i32, i32
  }
  func.func @transform_1(%arg0: i32) -> (i32, i32, i32, i32) {
    %c0_i32 = arith.constant 0 : i32
    %c0_i32_0 = arith.constant 0 : i32
    %c0_i32_1 = arith.constant 0 : i32
    %c0_i32_2 = arith.constant 0 : i32
    %c0_i32_3 = arith.constant 0 : i32
    return %c0_i32, %c0_i32_0, %c0_i32_1, %c0_i32_2 : i32, i32, i32, i32
  }
  func.func @transform_2(%arg0: i32) -> (i32, i32) {
    %c0_i32 = arith.constant 0 : i32
    %c0_i32_0 = arith.constant 0 : i32
    %c0_i32_1 = arith.constant 0 : i32
    return %c0_i32, %c0_i32_0 : i32, i32
  }
  func.func @transform_3(%arg0: i32) -> (i32, i32, i32) {
    %c0_i32 = arith.constant 0 : i32
    %c0_i32_0 = arith.constant 0 : i32
    %c0_i32_1 = arith.constant 0 : i32
    return %arg0, %c0_i32, %c0_i32_0 : i32, i32, i32
  }
}

</mosaic_0001>

<llo_original>
// kernel: _lambda_.3
$region0: #{_lambda_.3}
  #allocation0 [shape = 'u32[]', space=smem, size = 0x4, offset = 0x4, fixed_abs, tag = 'smem constant byte address 0x4 - core index']
  #allocation1 [shape = 'u32[144,128]{1,0:T(1,128)}', space=vmem, size = 0x12000, scoped, tag = 'internal scratch']
  #allocation2 [shape = 'f32[128,128]{1,0:T(8,128)}', space=vmem, size = 0x10000, scoped, tag = 'scratch operand']
  %s0 = inlined_call_operand.vmem [shape: f32[128,128], index: 0, kind: input, shape index: {}]
  %s1 = inlined_call_operand.vmem [shape: f32[128,128], index: 1, kind: input, shape index: {}]
  %s2 = inlined_call_operand.vmem [shape: f32[1,128], index: 2, kind: input, shape index: {}]
  %s3 = inlined_call_operand.vmem [shape: f32[128,128], index: 3, kind: output, shape index: {}]
  %s4 = sld [smem:[#allocation0]]
  $region30: #{_lambda_.3} parent=0
    _
  %s6 = ssub.s32 1, %s4
  %s7 = scalar_select 0, %s6, %s4
  // Predicated region
  $region2: #{_lambda_.3} parent=0 // pred_check
    _
  $region3: #{_lambda_.3} parent=0 // pred_check_branch
    %9 = sbr.rel (0) target = $region5
  $region4: #{_lambda_.3} parent=0 // pred_region
    _
  $region5: #{_lambda_.3} parent=0 // pred_fallthru
    _
  // Predicated region
  $region6: #{_lambda_.3} parent=0 // pred_check
    _
  $region7: #{_lambda_.3} parent=0 // pred_check_branch
    %11 = sbr.rel (0) target = $region9
  $region8: #{_lambda_.3} parent=0 // pred_region
    _
  $region9: #{_lambda_.3} parent=0 // pred_fallthru
    _
  // Predicated region
  $region10: #{_lambda_.3} parent=0 // pred_check
    _
  $region11: #{_lambda_.3} parent=0 // pred_check_branch
    %13 = sbr.rel (0) target = $region13
  $region12: #{_lambda_.3} parent=0 // pred_region
    _
  $region13: #{_lambda_.3} parent=0 // pred_fallthru
    _
  %p14 = scmp.eq.s32.totalorder 0, 0
  // Predicated region
  $region14: #{_lambda_.3} parent=0 // pred_check
    %p15 = pneg %p14
  $region15: #{_lambda_.3} parent=0 // pred_check_branch
    %17 = sbr.rel (%p15) target = $region17
  $region16: #{_lambda_.3} parent=0 // pred_region
    %18 = vst [vmem:[#allocation2] sm:$0xff] 0.0
    %19 = vst [vmem:[#allocation2 + $0x8] sm:$0xff] 0.0
    %20 = vst [vmem:[#allocation2 + $0x10] sm:$0xff] 0.0
    %21 = vst [vmem:[#allocation2 + $0x18] sm:$0xff] 0.0
    %22 = vst [vmem:[#allocation2 + $0x20] sm:$0xff] 0.0
    %23 = vst [vmem:[#allocation2 + $0x28] sm:$0xff] 0.0
    %24 = vst [vmem:[#allocation2 + $0x30] sm:$0xff] 0.0
    %25 = vst [vmem:[#allocation2 + $0x38] sm:$0xff] 0.0
    %26 = vst [vmem:[#allocation2 + $0x40] sm:$0xff] 0.0
    %27 = vst [vmem:[#allocation2 + $0x48] sm:$0xff] 0.0
    %28 = vst [vmem:[#allocation2 + $0x50] sm:$0xff] 0.0
    %29 = vst [vmem:[#allocation2 + $0x58] sm:$0xff] 0.0
    %30 = vst [vmem:[#allocation2 + $0x60] sm:$0xff] 0.0
    %31 = vst [vmem:[#allocation2 + $0x68] sm:$0xff] 0.0
    %32 = vst [vmem:[#allocation2 + $0x70] sm:$0xff] 0.0
    %33 = vst [vmem:[#allocation2 + $0x78] sm:$0xff] 0.0
  $region17: #{_lambda_.3} parent=0 // pred_fallthru
    _
  %v34 = vld [vmem:[#allocation2] sm:$0xff]
  %v35 = vld [vmem:[#allocation2 + $0x8] sm:$0xff]
  %v36 = vld [vmem:[#allocation2 + $0x10] sm:$0xff]
  %v37 = vld [vmem:[#allocation2 + $0x18] sm:$0xff]
  %v38 = vld [vmem:[#allocation2 + $0x20] sm:$0xff]
  %v39 = vld [vmem:[#allocation2 + $0x28] sm:$0xff]
  %v40 = vld [vmem:[#allocation2 + $0x30] sm:$0xff]
  %v41 = vld [vmem:[#allocation2 + $0x38] sm:$0xff]
  %v42 = vld [vmem:[#allocation2 + $0x40] sm:$0xff]
  %v43 = vld [vmem:[#allocation2 + $0x48] sm:$0xff]
  %v44 = vld [vmem:[#allocation2 + $0x50] sm:$0xff]
  %v45 = vld [vmem:[#allocation2 + $0x58] sm:$0xff]
  %v46 = vld [vmem:[#allocation2 + $0x60] sm:$0xff]
  %v47 = vld [vmem:[#allocation2 + $0x68] sm:$0xff]
  %v48 = vld [vmem:[#allocation2 + $0x70] sm:$0xff]
  %v49 = vld [vmem:[#allocation2 + $0x78] sm:$0xff]
  %v50 = vld [vmem:[%s0] sm:$0xff]
  %v51 = vld [vmem:[%s0 + $0x8] sm:$0xff]
  %v52 = vld [vmem:[%s0 + $0x10] sm:$0xff]
  %v53 = vld [vmem:[%s0 + $0x18] sm:$0xff]
  %v54 = vld [vmem:[%s0 + $0x20] sm:$0xff]
  %v55 = vld [vmem:[%s0 + $0x28] sm:$0xff]
  %v56 = vld [vmem:[%s0 + $0x30] sm:$0xff]
  %v57 = vld [vmem:[%s0 + $0x38] sm:$0xff]
  %v58 = vld [vmem:[%s0 + $0x40] sm:$0xff]
  %v59 = vld [vmem:[%s0 + $0x48] sm:$0xff]
  %v60 = vld [vmem:[%s0 + $0x50] sm:$0xff]
  %v61 = vld [vmem:[%s0 + $0x58] sm:$0xff]
  %v62 = vld [vmem:[%s0 + $0x60] sm:$0xff]
  %v63 = vld [vmem:[%s0 + $0x68] sm:$0xff]
  %v64 = vld [vmem:[%s0 + $0x70] sm:$0xff]
  %v65 = vld [vmem:[%s0 + $0x78] sm:$0xff]
  %v66 = vld [vmem:[%s1] sm:$0xff]
  %v67 = vld [vmem:[%s1 + $0x8] sm:$0xff]
  %v68 = vld [vmem:[%s1 + $0x10] sm:$0xff]
  %v69 = vld [vmem:[%s1 + $0x18] sm:$0xff]
  %v70 = vld [vmem:[%s1 + $0x20] sm:$0xff]
  %v71 = vld [vmem:[%s1 + $0x28] sm:$0xff]
  %v72 = vld [vmem:[%s1 + $0x30] sm:$0xff]
  %v73 = vld [vmem:[%s1 + $0x38] sm:$0xff]
  %v74 = vld [vmem:[%s1 + $0x40] sm:$0xff]
  %v75 = vld [vmem:[%s1 + $0x48] sm:$0xff]
  %v76 = vld [vmem:[%s1 + $0x50] sm:$0xff]
  %v77 = vld [vmem:[%s1 + $0x58] sm:$0xff]
  %v78 = vld [vmem:[%s1 + $0x60] sm:$0xff]
  %v79 = vld [vmem:[%s1 + $0x68] sm:$0xff]
  %v80 = vld [vmem:[%s1 + $0x70] sm:$0xff]
  %v81 = vld [vmem:[%s1 + $0x78] sm:$0xff]
  %82 = vmatprep.subr.mxu0 0.0
  %83 = vmatpush1.msra.mxu0 %v66
  %84 = vmatprep.subr.mxu0 0.0
  %85 = vmatpush1.msra.mxu0 %v67
  %86 = vmatprep.subr.mxu0 0.0
  %87 = vmatpush1.msra.mxu0 %v68
  %88 = vmatprep.subr.mxu0 0.0
  %89 = vmatpush1.msra.mxu0 %v69
  %90 = vmatprep.subr.mxu0 0.0
  %91 = vmatpush1.msra.mxu0 %v70
  %92 = vmatprep.subr.mxu0 0.0
  %93 = vmatpush1.msra.mxu0 %v71
  %94 = vmatprep.subr.mxu0 0.0
  %95 = vmatpush1.msra.mxu0 %v72
  %96 = vmatprep.subr.mxu0 0.0
  %97 = vmatpush1.msra.mxu0 %v73
  %98 = vmatprep.subr.mxu0 0.0
  %99 = vmatpush1.msra.mxu0 %v74
  %100 = vmatprep.subr.mxu0 0.0
  %101 = vmatpush1.msra.mxu0 %v75
  %102 = vmatprep.subr.mxu0 0.0
  %103 = vmatpush1.msra.mxu0 %v76
  %104 = vmatprep.subr.mxu0 0.0
  %105 = vmatpush1.msra.mxu0 %v77
  %106 = vmatprep.subr.mxu0 0.0
  %107 = vmatpush1.msra.mxu0 %v78
  %108 = vmatprep.subr.mxu0 0.0
  %109 = vmatpush1.msra.mxu0 %v79
  %110 = vmatprep.subr.mxu0 0.0
  %111 = vmatpush1.msra.mxu0 %v80
  %112 = vmatprep.subr.mxu0 0.0
  %113 = vmatpush1.msra.mxu0 %v81
  %114 = vmatprep.subr.mxu0 0.0
  %115 = vmatpush1.msra.mxu0 0.0
  %116 = vmatprep.subr.mxu0 0.0
  %117 = vmatpush1.msra.mxu0 0.0
  %118 = vmatprep.subr.mxu0 0.0
  %119 = vmatpush1.msra.mxu0 0.0
  %120 = vmatprep.subr.mxu0 0.0
  %121 = vmatpush1.msra.mxu0 0.0
  %122 = vmatprep.subr.mxu0 0.0
  %123 = vmatpush1.msra.mxu0 0.0
  %124 = vmatprep.subr.mxu0 0.0
  %125 = vmatpush1.msra.mxu0 0.0
  %126 = vmatprep.subr.mxu0 0.0
  %127 = vmatpush1.msra.mxu0 0.0
  %128 = vmatprep.subr.mxu0 0.0
  %129 = vmatpush1.msra.mxu0 0.0
  %130 = vmatprep.subr.mxu0 0.0
  %131 = vmatpush1.msra.mxu0 0.0
  %132 = vmatprep.subr.mxu0 0.0
  %133 = vmatpush1.msra.mxu0 0.0
  %134 = vmatprep.subr.mxu0 0.0
  %135 = vmatpush1.msra.mxu0 0.0
  %136 = vmatprep.subr.mxu0 0.0
  %137 = vmatpush1.msra.mxu0 0.0
  %138 = vmatprep.subr.mxu0 0.0
  %139 = vmatpush1.msra.mxu0 0.0
  %140 = vmatprep.subr.mxu0 0.0
  %141 = vmatpush1.msra.mxu0 0.0
  %142 = vmatprep.subr.mxu0 0.0
  %143 = vmatpush1.msra.mxu0 0.0
  %144 = vmatprep.subr.mxu0 0.0
  %145 = vmatpush1.msra.mxu0 0.0
  %146 = vmatprep.mubr.f32.mxu0 0.0
  %147 = vmatmul.mubr.f32.gmra.mrb[0].mxu0 %v50
  %v148 = vpop.f32.mrb[0].mxu0
  %v149 = vadd.f32 0.0, %v148
  %v150 = vpop.f32.mrb[0].mxu0
  %151 = vmatprep.mubr.f32.mxu0 0.0
  %152 = vmatmul.mubr.f32.gmra.mrb[0].mxu0 %v51
  %v153 = vpop.f32.mrb[0].mxu0
  %v154 = vadd.f32 0.0, %v153
  %v155 = vpop.f32.mrb[0].mxu0
  %156 = vmatprep.mubr.f32.mxu0 0.0
  %157 = vmatmul.mubr.f32.gmra.mrb[0].mxu0 %v52
  %v158 = vpop.f32.mrb[0].mxu0
  %v159 = vadd.f32 0.0, %v158
  %v160 = vpop.f32.mrb[0].mxu0
  %161 = vmatprep.mubr.f32.mxu0 0.0
  %162 = vmatmul.mubr.f32.gmra.mrb[0].mxu0 %v53
  %v163 = vpop.f32.mrb[0].mxu0
  %v164 = vadd.f32 0.0, %v163
  %v165 = vpop.f32.mrb[0].mxu0
  %166 = vmatprep.mubr.f32.mxu0 0.0
  %167 = vmatmul.mubr.f32.gmra.mrb[0].mxu0 %v54
  %v168 = vpop.f32.mrb[0].mxu0
  %v169 = vadd.f32 0.0, %v168
  %v170 = vpop.f32.mrb[0].mxu0
  %171 = vmatprep.mubr.f32.mxu0 0.0
  %172 = vmatmul.mubr.f32.gmra.mrb[0].mxu0 %v55
  %v173 = vpop.f32.mrb[0].mxu0
  %v174 = vadd.f32 0.0, %v173
  %v175 = vpop.f32.mrb[0].mxu0
  %176 = vmatprep.mubr.f32.mxu0 0.0
  %177 = vmatmul.mubr.f32.gmra.mrb[0].mxu0 %v56
  %v178 = vpop.f32.mrb[0].mxu0
  %v179 = vadd.f32 0.0, %v178
  %v180 = vpop.f32.mrb[0].mxu0
  %181 = vmatprep.mubr.f32.mxu0 0.0
  %182 = vmatmul.mubr.f32.gmra.mrb[0].mxu0 %v57
  %v183 = vpop.f32.mrb[0].mxu0
  %v184 = vadd.f32 0.0, %v183
  %v185 = vpop.f32.mrb[0].mxu0
  %186 = vmatprep.mubr.f32.mxu0 0.0
  %187 = vmatmul.mubr.f32.gmra.mrb[0].mxu0 %v58
  %v188 = vpop.f32.mrb[0].mxu0
  %v189 = vadd.f32 0.0, %v188
  %v190 = vpop.f32.mrb[0].mxu0
  %191 = vmatprep.mubr.f32.mxu0 0.0
  %192 = vmatmul.mubr.f32.gmra.mrb[0].mxu0 %v59
  %v193 = vpop.f32.mrb[0].mxu0
  %v194 = vadd.f32 0.0, %v193
  %v195 = vpop.f32.mrb[0].mxu0
  %196 = vmatprep.mubr.f32.mxu0 0.0
  %197 = vmatmul.mubr.f32.gmra.mrb[0].mxu0 %v60
  %v198 = vpop.f32.mrb[0].mxu0
  %v199 = vadd.f32 0.0, %v198
  %v200 = vpop.f32.mrb[0].mxu0
  %201 = vmatprep.mubr.f32.mxu0 0.0
  %202 = vmatmul.mubr.f32.gmra.mrb[0].mxu0 %v61
  %v203 = vpop.f32.mrb[0].mxu0
  %v204 = vadd.f32 0.0, %v203
  %v205 = vpop.f32.mrb[0].mxu0
  %206 = vmatprep.mubr.f32.mxu0 0.0
  %207 = vmatmul.mubr.f32.gmra.mrb[0].mxu0 %v62
  %v208 = vpop.f32.mrb[0].mxu0
  %v209 = vadd.f32 0.0, %v208
  %v210 = vpop.f32.mrb[0].mxu0
  %211 = vmatprep.mubr.f32.mxu0 0.0
  %212 = vmatmul.mubr.f32.gmra.mrb[0].mxu0 %v63
  %v213 = vpop.f32.mrb[0].mxu0
  %v214 = vadd.f32 0.0, %v213
  %v215 = vpop.f32.mrb[0].mxu0
  %216 = vmatprep.mubr.f32.mxu0 0.0
  %217 = vmatmul.mubr.f32.gmra.mrb[0].mxu0 %v64
  %v218 = vpop.f32.mrb[0].mxu0
  %v219 = vadd.f32 0.0, %v218
  %v220 = vpop.f32.mrb[0].mxu0
  %221 = vmatprep.mubr.f32.mxu0 0.0
  %222 = vmatmul.mubr.f32.gmra.mrb[0].mxu0 %v65
  %v223 = vpop.f32.mrb[0].mxu0
  %v224 = vadd.f32 0.0, %v223
  %v225 = vpop.f32.mrb[0].mxu0
  %226 = vdwg.mxu0
  %v227 = vadd.f32 %v34, %v149
  %v228 = vadd.f32 %v35, %v154
  %v229 = vadd.f32 %v36, %v159
  %v230 = vadd.f32 %v37, %v164
  %v231 = vadd.f32 %v38, %v169
  %v232 = vadd.f32 %v39, %v174
  %v233 = vadd.f32 %v40, %v179
  %v234 = vadd.f32 %v41, %v184
  %v235 = vadd.f32 %v42, %v189
  %v236 = vadd.f32 %v43, %v194
  %v237 = vadd.f32 %v44, %v199
  %v238 = vadd.f32 %v45, %v204
  %v239 = vadd.f32 %v46, %v209
  %v240 = vadd.f32 %v47, %v214
  %v241 = vadd.f32 %v48, %v219
  %v242 = vadd.f32 %v49, %v224
  %243 = vst [vmem:[#allocation2] sm:$0xff] %v227
  %244 = vst [vmem:[#allocation2 + $0x8] sm:$0xff] %v228
  %245 = vst [vmem:[#allocation2 + $0x10] sm:$0xff] %v229
  %246 = vst [vmem:[#allocation2 + $0x18] sm:$0xff] %v230
  %247 = vst [vmem:[#allocation2 + $0x20] sm:$0xff] %v231
  %248 = vst [vmem:[#allocation2 + $0x28] sm:$0xff] %v232
  %249 = vst [vmem:[#allocation2 + $0x30] sm:$0xff] %v233
  %250 = vst [vmem:[#allocation2 + $0x38] sm:$0xff] %v234
  %251 = vst [vmem:[#allocation2 + $0x40] sm:$0xff] %v235
  %252 = vst [vmem:[#allocation2 + $0x48] sm:$0xff] %v236
  %253 = vst [vmem:[#allocation2 + $0x50] sm:$0xff] %v237
  %254 = vst [vmem:[#allocation2 + $0x58] sm:$0xff] %v238
  %255 = vst [vmem:[#allocation2 + $0x60] sm:$0xff] %v239
  %256 = vst [vmem:[#allocation2 + $0x68] sm:$0xff] %v240
  %257 = vst [vmem:[#allocation2 + $0x70] sm:$0xff] %v241
  %258 = vst [vmem:[#allocation2 + $0x78] sm:$0xff] %v242
  // Predicated region
  $region18: #{_lambda_.3} parent=0 // pred_check
    %p259 = pneg %p14
  $region19: #{_lambda_.3} parent=0 // pred_check_branch
    %261 = sbr.rel (%p259) target = $region21
  $region20: #{_lambda_.3} parent=0 // pred_region
    %v262 = vld [vmem:[#allocation2] sm:$0xff]
    %v263 = vld [vmem:[#allocation2 + $0x8] sm:$0xff]
    %v264 = vld [vmem:[#allocation2 + $0x10] sm:$0xff]
    %v265 = vld [vmem:[#allocation2 + $0x18] sm:$0xff]
    %v266 = vld [vmem:[#allocation2 + $0x20] sm:$0xff]
    %v267 = vld [vmem:[#allocation2 + $0x28] sm:$0xff]
    %v268 = vld [vmem:[#allocation2 + $0x30] sm:$0xff]
    %v269 = vld [vmem:[#allocation2 + $0x38] sm:$0xff]
    %v270 = vld [vmem:[#allocation2 + $0x40] sm:$0xff]
    %v271 = vld [vmem:[#allocation2 + $0x48] sm:$0xff]
    %v272 = vld [vmem:[#allocation2 + $0x50] sm:$0xff]
    %v273 = vld [vmem:[#allocation2 + $0x58] sm:$0xff]
    %v274 = vld [vmem:[#allocation2 + $0x60] sm:$0xff]
    %v275 = vld [vmem:[#allocation2 + $0x68] sm:$0xff]
    %v276 = vld [vmem:[#allocation2 + $0x70] sm:$0xff]
    %v277 = vld [vmem:[#allocation2 + $0x78] sm:$0xff]
    %v278 = vld [vmem:[%s2] sm:$0x1]
    %v280 = vlaneseq
    %v281 = vshrl.u32 %v280, 7
    %v282 = vsub.s32 0, %v281
    %v283 = vrot.slane %v278, %v282
    %v285 = vadd.f32 %v262, %v283
    %v286 = vadd.f32 %v263, %v283
    %v287 = vadd.f32 %v264, %v283
    %v288 = vadd.f32 %v265, %v283
    %v289 = vadd.f32 %v266, %v283
    %v290 = vadd.f32 %v267, %v283
    %v291 = vadd.f32 %v268, %v283
    %v292 = vadd.f32 %v269, %v283
    %v293 = vadd.f32 %v270, %v283
    %v294 = vadd.f32 %v271, %v283
    %v295 = vadd.f32 %v272, %v283
    %v296 = vadd.f32 %v273, %v283
    %v297 = vadd.f32 %v274, %v283
    %v298 = vadd.f32 %v275, %v283
    %v299 = vadd.f32 %v276, %v283
    %v300 = vadd.f32 %v277, %v283
    %v301 = vmax.f32 %v285, 0.0
    %v302 = vmax.f32 %v286, 0.0
    %v303 = vmax.f32 %v287, 0.0
    %v304 = vmax.f32 %v288, 0.0
    %v305 = vmax.f32 %v289, 0.0
    %v306 = vmax.f32 %v290, 0.0
    %v307 = vmax.f32 %v291, 0.0
    %v308 = vmax.f32 %v292, 0.0
    %v309 = vmax.f32 %v293, 0.0
    %v310 = vmax.f32 %v294, 0.0
    %v311 = vmax.f32 %v295, 0.0
    %v312 = vmax.f32 %v296, 0.0
    %v313 = vmax.f32 %v297, 0.0
    %v314 = vmax.f32 %v298, 0.0
    %v315 = vmax.f32 %v299, 0.0
    %v316 = vmax.f32 %v300, 0.0
    %317 = vst [vmem:[%s3] sm:$0xff] %v301
    %318 = vst [vmem:[%s3 + $0x8] sm:$0xff] %v302
    %319 = vst [vmem:[%s3 + $0x10] sm:$0xff] %v303
    %320 = vst [vmem:[%s3 + $0x18] sm:$0xff] %v304
    %321 = vst [vmem:[%s3 + $0x20] sm:$0xff] %v305
    %322 = vst [vmem:[%s3 + $0x28] sm:$0xff] %v306
    %323 = vst [vmem:[%s3 + $0x30] sm:$0xff] %v307
    %324 = vst [vmem:[%s3 + $0x38] sm:$0xff] %v308
    %325 = vst [vmem:[%s3 + $0x40] sm:$0xff] %v309
    %326 = vst [vmem:[%s3 + $0x48] sm:$0xff] %v310
    %327 = vst [vmem:[%s3 + $0x50] sm:$0xff] %v311
    %328 = vst [vmem:[%s3 + $0x58] sm:$0xff] %v312
    %329 = vst [vmem:[%s3 + $0x60] sm:$0xff] %v313
    %330 = vst [vmem:[%s3 + $0x68] sm:$0xff] %v314
    %331 = vst [vmem:[%s3 + $0x70] sm:$0xff] %v315
    %332 = vst [vmem:[%s3 + $0x78] sm:$0xff] %v316
  $region21: #{_lambda_.3} parent=0 // pred_fallthru
    _
  // Predicated region
  $region22: #{_lambda_.3} parent=0 // pred_check
    _
  $region23: #{_lambda_.3} parent=0 // pred_check_branch
    %334 = sbr.rel (0) target = $region25
  $region24: #{_lambda_.3} parent=0 // pred_region
    _
  $region25: #{_lambda_.3} parent=0 // pred_fallthru
    _
  // Predicated region
  $region26: #{_lambda_.3} parent=0 // pred_check
    _
  $region27: #{_lambda_.3} parent=0 // pred_check_branch
    %336 = sbr.rel (0) target = $region29
  $region28: #{_lambda_.3} parent=0 // pred_region
    _
  $region29: #{_lambda_.3} parent=0 // pred_fallthru
    _

// kernel: _lambda_.5
$region0: #{_lambda_.5}
  #allocation0 [shape = 'u32[]', space=smem, size = 0x4, offset = 0x4, fixed_abs, tag = 'smem constant byte address 0x4 - core index']
  #allocation1 [shape = 'u32[144,128]{1,0:T(1,128)}', space=vmem, size = 0x12000, scoped, tag = 'internal scratch']
  #allocation2 [shape = 'f32[128,128]{1,0:T(8,128)}', space=vmem, size = 0x10000, scoped, tag = 'scratch operand']
  %s0 = inlined_call_operand.vmem [shape: f32[128,128], index: 0, kind: input, shape index: {}]
  %s1 = inlined_call_operand.vmem [shape: f32[128,128], index: 1, kind: input, shape index: {}]
  %s2 = inlined_call_operand.vmem [shape: f32[1,128], index: 2, kind: input, shape index: {}]
  %s3 = inlined_call_operand.vmem [shape: f32[128,128], index: 3, kind: input, shape index: {}]
  %s4 = inlined_call_operand.vmem [shape: f32[128,128], index: 4, kind: input, shape index: {}]
  %s5 = inlined_call_operand.vmem [shape: f32[1,128], index: 5, kind: input, shape index: {}]
  %s6 = inlined_call_operand.vmem [shape: f32[128,128], index: 6, kind: output, shape index: {}]
  %s7 = sld [smem:[#allocation0]]
  $region42: #{_lambda_.5} parent=0
    _
  %s9 = ssub.s32 1, %s7
  %s10 = scalar_select 0, %s9, %s7
  // Predicated region
  $region2: #{_lambda_.5} parent=0 // pred_check
    _
  $region3: #{_lambda_.5} parent=0 // pred_check_branch
    %12 = sbr.rel (0) target = $region5
  $region4: #{_lambda_.5} parent=0 // pred_region
    _
  $region5: #{_lambda_.5} parent=0 // pred_fallthru
    _
  // Predicated region
  $region6: #{_lambda_.5} parent=0 // pred_check
    _
  $region7: #{_lambda_.5} parent=0 // pred_check_branch
    %14 = sbr.rel (0) target = $region9
  $region8: #{_lambda_.5} parent=0 // pred_region
    _
  $region9: #{_lambda_.5} parent=0 // pred_fallthru
    _
  // Predicated region
  $region10: #{_lambda_.5} parent=0 // pred_check
    _
  $region11: #{_lambda_.5} parent=0 // pred_check_branch
    %16 = sbr.rel (0) target = $region13
  $region12: #{_lambda_.5} parent=0 // pred_region
    _
  $region13: #{_lambda_.5} parent=0 // pred_fallthru
    _
  // Predicated region
  $region14: #{_lambda_.5} parent=0 // pred_check
    _
  $region15: #{_lambda_.5} parent=0 // pred_check_branch
    %18 = sbr.rel (0) target = $region17
  $region16: #{_lambda_.5} parent=0 // pred_region
    _
  $region17: #{_lambda_.5} parent=0 // pred_fallthru
    _
  // Predicated region
  $region18: #{_lambda_.5} parent=0 // pred_check
    _
  $region19: #{_lambda_.5} parent=0 // pred_check_branch
    %20 = sbr.rel (0) target = $region21
  $region20: #{_lambda_.5} parent=0 // pred_region
    _
  $region21: #{_lambda_.5} parent=0 // pred_fallthru
    _
  // Predicated region
  $region22: #{_lambda_.5} parent=0 // pred_check
    _
  $region23: #{_lambda_.5} parent=0 // pred_check_branch
    %22 = sbr.rel (0) target = $region25
  $region24: #{_lambda_.5} parent=0 // pred_region
    _
  $region25: #{_lambda_.5} parent=0 // pred_fallthru
    _
  %p23 = scmp.eq.s32.totalorder 0, 0
  // Predicated region
  $region26: #{_lambda_.5} parent=0 // pred_check
    %p24 = pneg %p23
  $region27: #{_lambda_.5} parent=0 // pred_check_branch
    %26 = sbr.rel (%p24) target = $region29
  $region28: #{_lambda_.5} parent=0 // pred_region
    %27 = vst [vmem:[#allocation2] sm:$0xff] 0.0
    %28 = vst [vmem:[#allocation2 + $0x8] sm:$0xff] 0.0
    %29 = vst [vmem:[#allocation2 + $0x10] sm:$0xff] 0.0
    %30 = vst [vmem:[#allocation2 + $0x18] sm:$0xff] 0.0
    %31 = vst [vmem:[#allocation2 + $0x20] sm:$0xff] 0.0
    %32 = vst [vmem:[#allocation2 + $0x28] sm:$0xff] 0.0
    %33 = vst [vmem:[#allocation2 + $0x30] sm:$0xff] 0.0
    %34 = vst [vmem:[#allocation2 + $0x38] sm:$0xff] 0.0
    %35 = vst [vmem:[#allocation2 + $0x40] sm:$0xff] 0.0
    %36 = vst [vmem:[#allocation2 + $0x48] sm:$0xff] 0.0
    %37 = vst [vmem:[#allocation2 + $0x50] sm:$0xff] 0.0
    %38 = vst [vmem:[#allocation2 + $0x58] sm:$0xff] 0.0
    %39 = vst [vmem:[#allocation2 + $0x60] sm:$0xff] 0.0
    %40 = vst [vmem:[#allocation2 + $0x68] sm:$0xff] 0.0
    %41 = vst [vmem:[#allocation2 + $0x70] sm:$0xff] 0.0
    %42 = vst [vmem:[#allocation2 + $0x78] sm:$0xff] 0.0
  $region29: #{_lambda_.5} parent=0 // pred_fallthru
    _
  %v43 = vld [vmem:[#allocation2] sm:$0xff]
  %v44 = vld [vmem:[#allocation2 + $0x8] sm:$0xff]
  %v45 = vld [vmem:[#allocation2 + $0x10] sm:$0xff]
  %v46 = vld [vmem:[#allocation2 + $0x18] sm:$0xff]
  %v47 = vld [vmem:[#allocation2 + $0x20] sm:$0xff]
  %v48 = vld [vmem:[#allocation2 + $0x28] sm:$0xff]
  %v49 = vld [vmem:[#allocation2 + $0x30] sm:$0xff]
  %v50 = vld [vmem:[#allocation2 + $0x38] sm:$0xff]
  %v51 = vld [vmem:[#allocation2 + $0x40] sm:$0xff]
  %v52 = vld [vmem:[#allocation2 + $0x48] sm:$0xff]
  %v53 = vld [vmem:[#allocation2 + $0x50] sm:$0xff]
  %v54 = vld [vmem:[#allocation2 + $0x58] sm:$0xff]
  %v55 = vld [vmem:[#allocation2 + $0x60] sm:$0xff]
  %v56 = vld [vmem:[#allocation2 + $0x68] sm:$0xff]
  %v57 = vld [vmem:[#allocation2 + $0x70] sm:$0xff]
  %v58 = vld [vmem:[#allocation2 + $0x78] sm:$0xff]
  %v59 = vld [vmem:[%s0] sm:$0xff]
  %v60 = vld [vmem:[%s0 + $0x8] sm:$0xff]
  %v61 = vld [vmem:[%s0 + $0x10] sm:$0xff]
  %v62 = vld [vmem:[%s0 + $0x18] sm:$0xff]
  %v63 = vld [vmem:[%s0 + $0x20] sm:$0xff]
  %v64 = vld [vmem:[%s0 + $0x28] sm:$0xff]
  %v65 = vld [vmem:[%s0 + $0x30] sm:$0xff]
  %v66 = vld [vmem:[%s0 + $0x38] sm:$0xff]
  %v67 = vld [vmem:[%s0 + $0x40] sm:$0xff]
  %v68 = vld [vmem:[%s0 + $0x48] sm:$0xff]
  %v69 = vld [vmem:[%s0 + $0x50] sm:$0xff]
  %v70 = vld [vmem:[%s0 + $0x58] sm:$0xff]
  %v71 = vld [vmem:[%s0 + $0x60] sm:$0xff]
  %v72 = vld [vmem:[%s0 + $0x68] sm:$0xff]
  %v73 = vld [vmem:[%s0 + $0x70] sm:$0xff]
  %v74 = vld [vmem:[%s0 + $0x78] sm:$0xff]
  %v75 = vld [vmem:[%s1] sm:$0xff]
  %v76 = vld [vmem:[%s1 + $0x8] sm:$0xff]
  %v77 = vld [vmem:[%s1 + $0x10] sm:$0xff]
  %v78 = vld [vmem:[%s1 + $0x18] sm:$0xff]
  %v79 = vld [vmem:[%s1 + $0x20] sm:$0xff]
  %v80 = vld [vmem:[%s1 + $0x28] sm:$0xff]
  %v81 = vld [vmem:[%s1 + $0x30] sm:$0xff]
  %v82 = vld [vmem:[%s1 + $0x38] sm:$0xff]
  %v83 = vld [vmem:[%s1 + $0x40] sm:$0xff]
  %v84 = vld [vmem:[%s1 + $0x48] sm:$0xff]
  %v85 = vld [vmem:[%s1 + $0x50] sm:$0xff]
  %v86 = vld [vmem:[%s1 + $0x58] sm:$0xff]
  %v87 = vld [vmem:[%s1 + $0x60] sm:$0xff]
  %v88 = vld [vmem:[%s1 + $0x68] sm:$0xff]
  %v89 = vld [vmem:[%s1 + $0x70] sm:$0xff]
  %v90 = vld [vmem:[%s1 + $0x78] sm:$0xff]
  %91 = vmatprep.subr.mxu0 0.0
  %92 = vmatpush1.msra.mxu0 %v75
  %93 = vmatprep.subr.mxu0 0.0
  %94 = vmatpush1.msra.mxu0 %v76
  %95 = vmatprep.subr.mxu0 0.0
  %96 = vmatpush1.msra.mxu0 %v77
  %97 = vmatprep.subr.mxu0 0.0
  %98 = vmatpush1.msra.mxu0 %v78
  %99 = vmatprep.subr.mxu0 0.0
  %100 = vmatpush1.msra.mxu0 %v79
  %101 = vmatprep.subr.mxu0 0.0
  %102 = vmatpush1.msra.mxu0 %v80
  %103 = vmatprep.subr.mxu0 0.0
  %104 = vmatpush1.msra.mxu0 %v81
  %105 = vmatprep.subr.mxu0 0.0
  %106 = vmatpush1.msra.mxu0 %v82
  %107 = vmatprep.subr.mxu0 0.0
  %108 = vmatpush1.msra.mxu0 %v83
  %109 = vmatprep.subr.mxu0 0.0
  %110 = vmatpush1.msra.mxu0 %v84
  %111 = vmatprep.subr.mxu0 0.0
  %112 = vmatpush1.msra.mxu0 %v85
  %113 = vmatprep.subr.mxu0 0.0
  %114 = vmatpush1.msra.mxu0 %v86
  %115 = vmatprep.subr.mxu0 0.0
  %116 = vmatpush1.msra.mxu0 %v87
  %117 = vmatprep.subr.mxu0 0.0
  %118 = vmatpush1.msra.mxu0 %v88
  %119 = vmatprep.subr.mxu0 0.0
  %120 = vmatpush1.msra.mxu0 %v89
  %121 = vmatprep.subr.mxu0 0.0
  %122 = vmatpush1.msra.mxu0 %v90
  %123 = vmatprep.subr.mxu0 0.0
  %124 = vmatpush1.msra.mxu0 0.0
  %125 = vmatprep.subr.mxu0 0.0
  %126 = vmatpush1.msra.mxu0 0.0
  %127 = vmatprep.subr.mxu0 0.0
  %128 = vmatpush1.msra.mxu0 0.0
  %129 = vmatprep.subr.mxu0 0.0
  %130 = vmatpush1.msra.mxu0 0.0
  %131 = vmatprep.subr.mxu0 0.0
  %132 = vmatpush1.msra.mxu0 0.0
  %133 = vmatprep.subr.mxu0 0.0
  %134 = vmatpush1.msra.mxu0 0.0
  %135 = vmatprep.subr.mxu0 0.0
  %136 = vmatpush1.msra.mxu0 0.0
  %137 = vmatprep.subr.mxu0 0.0
  %138 = vmatpush1.msra.mxu0 0.0
  %139 = vmatprep.subr.mxu0 0.0
  %140 = vmatpush1.msra.mxu0 0.0
  %141 = vmatprep.subr.mxu0 0.0
  %142 = vmatpush1.msra.mxu0 0.0
  %143 = vmatprep.subr.mxu0 0.0
  %144 = vmatpush1.msra.mxu0 0.0
  %145 = vmatprep.subr.mxu0 0.0
  %146 = vmatpush1.msra.mxu0 0.0
  %147 = vmatprep.subr.mxu0 0.0
  %148 = vmatpush1.msra.mxu0 0.0
  %149 = vmatprep.subr.mxu0 0.0
  %150 = vmatpush1.msra.mxu0 0.0
  %151 = vmatprep.subr.mxu0 0.0
  %152 = vmatpush1.msra.mxu0 0.0
  %153 = vmatprep.subr.mxu0 0.0
  %154 = vmatpush1.msra.mxu0 0.0
  %155 = vmatprep.mubr.f32.mxu0 0.0
  %156 = vmatmul.mubr.f32.gmra.mrb[0].mxu0 %v59
  %v157 = vpop.f32.mrb[0].mxu0
  %v158 = vadd.f32 0.0, %v157
  %v159 = vpop.f32.mrb[0].mxu0
  %160 = vmatprep.mubr.f32.mxu0 0.0
  %161 = vmatmul.mubr.f32.gmra.mrb[0].mxu0 %v60
  %v162 = vpop.f32.mrb[0].mxu0
  %v163 = vadd.f32 0.0, %v162
  %v164 = vpop.f32.mrb[0].mxu0
  %165 = vmatprep.mubr.f32.mxu0 0.0
  %166 = vmatmul.mubr.f32.gmra.mrb[0].mxu0 %v61
  %v167 = vpop.f32.mrb[0].mxu0
  %v168 = vadd.f32 0.0, %v167
  %v169 = vpop.f32.mrb[0].mxu0
  %170 = vmatprep.mubr.f32.mxu0 0.0
  %171 = vmatmul.mubr.f32.gmra.mrb[0].mxu0 %v62
  %v172 = vpop.f32.mrb[0].mxu0
  %v173 = vadd.f32 0.0, %v172
  %v174 = vpop.f32.mrb[0].mxu0
  %175 = vmatprep.mubr.f32.mxu0 0.0
  %176 = vmatmul.mubr.f32.gmra.mrb[0].mxu0 %v63
  %v177 = vpop.f32.mrb[0].mxu0
  %v178 = vadd.f32 0.0, %v177
  %v179 = vpop.f32.mrb[0].mxu0
  %180 = vmatprep.mubr.f32.mxu0 0.0
  %181 = vmatmul.mubr.f32.gmra.mrb[0].mxu0 %v64
  %v182 = vpop.f32.mrb[0].mxu0
  %v183 = vadd.f32 0.0, %v182
  %v184 = vpop.f32.mrb[0].mxu0
  %185 = vmatprep.mubr.f32.mxu0 0.0
  %186 = vmatmul.mubr.f32.gmra.mrb[0].mxu0 %v65
  %v187 = vpop.f32.mrb[0].mxu0
  %v188 = vadd.f32 0.0, %v187
  %v189 = vpop.f32.mrb[0].mxu0
  %190 = vmatprep.mubr.f32.mxu0 0.0
  %191 = vmatmul.mubr.f32.gmra.mrb[0].mxu0 %v66
  %v192 = vpop.f32.mrb[0].mxu0
  %v193 = vadd.f32 0.0, %v192
  %v194 = vpop.f32.mrb[0].mxu0
  %195 = vmatprep.mubr.f32.mxu0 0.0
  %196 = vmatmul.mubr.f32.gmra.mrb[0].mxu0 %v67
  %v197 = vpop.f32.mrb[0].mxu0
  %v198 = vadd.f32 0.0, %v197
  %v199 = vpop.f32.mrb[0].mxu0
  %200 = vmatprep.mubr.f32.mxu0 0.0
  %201 = vmatmul.mubr.f32.gmra.mrb[0].mxu0 %v68
  %v202 = vpop.f32.mrb[0].mxu0
  %v203 = vadd.f32 0.0, %v202
  %v204 = vpop.f32.mrb[0].mxu0
  %205 = vmatprep.mubr.f32.mxu0 0.0
  %206 = vmatmul.mubr.f32.gmra.mrb[0].mxu0 %v69
  %v207 = vpop.f32.mrb[0].mxu0
  %v208 = vadd.f32 0.0, %v207
  %v209 = vpop.f32.mrb[0].mxu0
  %210 = vmatprep.mubr.f32.mxu0 0.0
  %211 = vmatmul.mubr.f32.gmra.mrb[0].mxu0 %v70
  %v212 = vpop.f32.mrb[0].mxu0
  %v213 = vadd.f32 0.0, %v212
  %v214 = vpop.f32.mrb[0].mxu0
  %215 = vmatprep.mubr.f32.mxu0 0.0
  %216 = vmatmul.mubr.f32.gmra.mrb[0].mxu0 %v71
  %v217 = vpop.f32.mrb[0].mxu0
  %v218 = vadd.f32 0.0, %v217
  %v219 = vpop.f32.mrb[0].mxu0
  %220 = vmatprep.mubr.f32.mxu0 0.0
  %221 = vmatmul.mubr.f32.gmra.mrb[0].mxu0 %v72
  %v222 = vpop.f32.mrb[0].mxu0
  %v223 = vadd.f32 0.0, %v222
  %v224 = vpop.f32.mrb[0].mxu0
  %225 = vmatprep.mubr.f32.mxu0 0.0
  %226 = vmatmul.mubr.f32.gmra.mrb[0].mxu0 %v73
  %v227 = vpop.f32.mrb[0].mxu0
  %v228 = vadd.f32 0.0, %v227
  %v229 = vpop.f32.mrb[0].mxu0
  %230 = vmatprep.mubr.f32.mxu0 0.0
  %231 = vmatmul.mubr.f32.gmra.mrb[0].mxu0 %v74
  %v232 = vpop.f32.mrb[0].mxu0
  %v233 = vadd.f32 0.0, %v232
  %v234 = vpop.f32.mrb[0].mxu0
  %235 = vdwg.mxu0
  %v236 = vadd.f32 %v43, %v158
  %v237 = vadd.f32 %v44, %v163
  %v238 = vadd.f32 %v45, %v168
  %v239 = vadd.f32 %v46, %v173
  %v240 = vadd.f32 %v47, %v178
  %v241 = vadd.f32 %v48, %v183
  %v242 = vadd.f32 %v49, %v188
  %v243 = vadd.f32 %v50, %v193
  %v244 = vadd.f32 %v51, %v198
  %v245 = vadd.f32 %v52, %v203
  %v246 = vadd.f32 %v53, %v208
  %v247 = vadd.f32 %v54, %v213
  %v248 = vadd.f32 %v55, %v218
  %v249 = vadd.f32 %v56, %v223
  %v250 = vadd.f32 %v57, %v228
  %v251 = vadd.f32 %v58, %v233
  %252 = vst [vmem:[#allocation2] sm:$0xff] %v236
  %253 = vst [vmem:[#allocation2 + $0x8] sm:$0xff] %v237
  %254 = vst [vmem:[#allocation2 + $0x10] sm:$0xff] %v238
  %255 = vst [vmem:[#allocation2 + $0x18] sm:$0xff] %v239
  %256 = vst [vmem:[#allocation2 + $0x20] sm:$0xff] %v240
  %257 = vst [vmem:[#allocation2 + $0x28] sm:$0xff] %v241
  %258 = vst [vmem:[#allocation2 + $0x30] sm:$0xff] %v242
  %259 = vst [vmem:[#allocation2 + $0x38] sm:$0xff] %v243
  %260 = vst [vmem:[#allocation2 + $0x40] sm:$0xff] %v244
  %261 = vst [vmem:[#allocation2 + $0x48] sm:$0xff] %v245
  %262 = vst [vmem:[#allocation2 + $0x50] sm:$0xff] %v246
  %263 = vst [vmem:[#allocation2 + $0x58] sm:$0xff] %v247
  %264 = vst [vmem:[#allocation2 + $0x60] sm:$0xff] %v248
  %265 = vst [vmem:[#allocation2 + $0x68] sm:$0xff] %v249
  %266 = vst [vmem:[#allocation2 + $0x70] sm:$0xff] %v250
  %267 = vst [vmem:[#allocation2 + $0x78] sm:$0xff] %v251
  // Predicated region
  $region30: #{_lambda_.5} parent=0 // pred_check
    %p268 = pneg %p23
  $region31: #{_lambda_.5} parent=0 // pred_check_branch
    %270 = sbr.rel (%p268) target = $region33
  $region32: #{_lambda_.5} parent=0 // pred_region
    %v271 = vld [vmem:[#allocation2] sm:$0xff]
    %v272 = vld [vmem:[#allocation2 + $0x8] sm:$0xff]
    %v273 = vld [vmem:[#allocation2 + $0x10] sm:$0xff]
    %v274 = vld [vmem:[#allocation2 + $0x18] sm:$0xff]
    %v275 = vld [vmem:[#allocation2 + $0x20] sm:$0xff]
    %v276 = vld [vmem:[#allocation2 + $0x28] sm:$0xff]
    %v277 = vld [vmem:[#allocation2 + $0x30] sm:$0xff]
    %v278 = vld [vmem:[#allocation2 + $0x38] sm:$0xff]
    %v279 = vld [vmem:[#allocation2 + $0x40] sm:$0xff]
    %v280 = vld [vmem:[#allocation2 + $0x48] sm:$0xff]
    %v281 = vld [vmem:[#allocation2 + $0x50] sm:$0xff]
    %v282 = vld [vmem:[#allocation2 + $0x58] sm:$0xff]
    %v283 = vld [vmem:[#allocation2 + $0x60] sm:$0xff]
    %v284 = vld [vmem:[#allocation2 + $0x68] sm:$0xff]
    %v285 = vld [vmem:[#allocation2 + $0x70] sm:$0xff]
    %v286 = vld [vmem:[#allocation2 + $0x78] sm:$0xff]
    %v287 = vld [vmem:[%s2] sm:$0x1]
    %v289 = vlaneseq
    %v290 = vshrl.u32 %v289, 7
    %v291 = vsub.s32 0, %v290
    %v292 = vrot.slane %v287, %v291
    %v294 = vadd.f32 %v271, %v292
    %v295 = vadd.f32 %v272, %v292
    %v296 = vadd.f32 %v273, %v292
    %v297 = vadd.f32 %v274, %v292
    %v298 = vadd.f32 %v275, %v292
    %v299 = vadd.f32 %v276, %v292
    %v300 = vadd.f32 %v277, %v292
    %v301 = vadd.f32 %v278, %v292
    %v302 = vadd.f32 %v279, %v292
    %v303 = vadd.f32 %v280, %v292
    %v304 = vadd.f32 %v281, %v292
    %v305 = vadd.f32 %v282, %v292
    %v306 = vadd.f32 %v283, %v292
    %v307 = vadd.f32 %v284, %v292
    %v308 = vadd.f32 %v285, %v292
    %v309 = vadd.f32 %v286, %v292
    %v310 = vmax.f32 %v294, 0.0
    %v311 = vmax.f32 %v295, 0.0
    %v312 = vmax.f32 %v296, 0.0
    %v313 = vmax.f32 %v297, 0.0
    %v314 = vmax.f32 %v298, 0.0
    %v315 = vmax.f32 %v299, 0.0
    %v316 = vmax.f32 %v300, 0.0
    %v317 = vmax.f32 %v301, 0.0
    %v318 = vmax.f32 %v302, 0.0
    %v319 = vmax.f32 %v303, 0.0
    %v320 = vmax.f32 %v304, 0.0
    %v321 = vmax.f32 %v305, 0.0
    %v322 = vmax.f32 %v306, 0.0
    %v323 = vmax.f32 %v307, 0.0
    %v324 = vmax.f32 %v308, 0.0
    %v325 = vmax.f32 %v309, 0.0
    %v326 = vld [vmem:[%s3] sm:$0xff]
    %v327 = vld [vmem:[%s3 + $0x8] sm:$0xff]
    %v328 = vld [vmem:[%s3 + $0x10] sm:$0xff]
    %v329 = vld [vmem:[%s3 + $0x18] sm:$0xff]
    %v330 = vld [vmem:[%s3 + $0x20] sm:$0xff]
    %v331 = vld [vmem:[%s3 + $0x28] sm:$0xff]
    %v332 = vld [vmem:[%s3 + $0x30] sm:$0xff]
    %v333 = vld [vmem:[%s3 + $0x38] sm:$0xff]
    %v334 = vld [vmem:[%s3 + $0x40] sm:$0xff]
    %v335 = vld [vmem:[%s3 + $0x48] sm:$0xff]
    %v336 = vld [vmem:[%s3 + $0x50] sm:$0xff]
    %v337 = vld [vmem:[%s3 + $0x58] sm:$0xff]
    %v338 = vld [vmem:[%s3 + $0x60] sm:$0xff]
    %v339 = vld [vmem:[%s3 + $0x68] sm:$0xff]
    %v340 = vld [vmem:[%s3 + $0x70] sm:$0xff]
    %v341 = vld [vmem:[%s3 + $0x78] sm:$0xff]
    %v342 = vld [vmem:[%s4] sm:$0xff]
    %v343 = vld [vmem:[%s4 + $0x8] sm:$0xff]
    %v344 = vld [vmem:[%s4 + $0x10] sm:$0xff]
    %v345 = vld [vmem:[%s4 + $0x18] sm:$0xff]
    %v346 = vld [vmem:[%s4 + $0x20] sm:$0xff]
    %v347 = vld [vmem:[%s4 + $0x28] sm:$0xff]
    %v348 = vld [vmem:[%s4 + $0x30] sm:$0xff]
    %v349 = vld [vmem:[%s4 + $0x38] sm:$0xff]
    %v350 = vld [vmem:[%s4 + $0x40] sm:$0xff]
    %v351 = vld [vmem:[%s4 + $0x48] sm:$0xff]
    %v352 = vld [vmem:[%s4 + $0x50] sm:$0xff]
    %v353 = vld [vmem:[%s4 + $0x58] sm:$0xff]
    %v354 = vld [vmem:[%s4 + $0x60] sm:$0xff]
    %v355 = vld [vmem:[%s4 + $0x68] sm:$0xff]
    %v356 = vld [vmem:[%s4 + $0x70] sm:$0xff]
    %v357 = vld [vmem:[%s4 + $0x78] sm:$0xff]
    %v358 = vld [vmem:[%s5] sm:$0x1]
    %v360 = vlaneseq
    %v361 = vshrl.u32 %v360, 7
    %v362 = vsub.s32 0, %v361
    %v363 = vrot.slane %v358, %v362
    %365 = vmatprep.subr.mxu0 0.0
    %366 = vmatpush1.msra.mxu0 %v342
    %367 = vmatprep.subr.mxu0 0.0
    %368 = vmatpush1.msra.mxu0 %v343
    %369 = vmatprep.subr.mxu0 0.0
    %370 = vmatpush1.msra.mxu0 %v344
    %371 = vmatprep.subr.mxu0 0.0
    %372 = vmatpush1.msra.mxu0 %v345
    %373 = vmatprep.subr.mxu0 0.0
    %374 = vmatpush1.msra.mxu0 %v346
    %375 = vmatprep.subr.mxu0 0.0
    %376 = vmatpush1.msra.mxu0 %v347
    %377 = vmatprep.subr.mxu0 0.0
    %378 = vmatpush1.msra.mxu0 %v348
    %379 = vmatprep.subr.mxu0 0.0
    %380 = vmatpush1.msra.mxu0 %v349
    %381 = vmatprep.subr.mxu0 0.0
    %382 = vmatpush1.msra.mxu0 %v350
    %383 = vmatprep.subr.mxu0 0.0
    %384 = vmatpush1.msra.mxu0 %v351
    %385 = vmatprep.subr.mxu0 0.0
    %386 = vmatpush1.msra.mxu0 %v352
    %387 = vmatprep.subr.mxu0 0.0
    %388 = vmatpush1.msra.mxu0 %v353
    %389 = vmatprep.subr.mxu0 0.0
    %390 = vmatpush1.msra.mxu0 %v354
    %391 = vmatprep.subr.mxu0 0.0
    %392 = vmatpush1.msra.mxu0 %v355
    %393 = vmatprep.subr.mxu0 0.0
    %394 = vmatpush1.msra.mxu0 %v356
    %395 = vmatprep.subr.mxu0 0.0
    %396 = vmatpush1.msra.mxu0 %v357
    %397 = vmatprep.subr.mxu0 0.0
    %398 = vmatpush1.msra.mxu0 0.0
    %399 = vmatprep.subr.mxu0 0.0
    %400 = vmatpush1.msra.mxu0 0.0
    %401 = vmatprep.subr.mxu0 0.0
    %402 = vmatpush1.msra.mxu0 0.0
    %403 = vmatprep.subr.mxu0 0.0
    %404 = vmatpush1.msra.mxu0 0.0
    %405 = vmatprep.subr.mxu0 0.0
    %406 = vmatpush1.msra.mxu0 0.0
    %407 = vmatprep.subr.mxu0 0.0
    %408 = vmatpush1.msra.mxu0 0.0
    %409 = vmatprep.subr.mxu0 0.0
    %410 = vmatpush1.msra.mxu0 0.0
    %411 = vmatprep.subr.mxu0 0.0
    %412 = vmatpush1.msra.mxu0 0.0
    %413 = vmatprep.subr.mxu0 0.0
    %414 = vmatpush1.msra.mxu0 0.0
    %415 = vmatprep.subr.mxu0 0.0
    %416 = vmatpush1.msra.mxu0 0.0
    %417 = vmatprep.subr.mxu0 0.0
    %418 = vmatpush1.msra.mxu0 0.0
    %419 = vmatprep.subr.mxu0 0.0
    %420 = vmatpush1.msra.mxu0 0.0
    %421 = vmatprep.subr.mxu0 0.0
    %422 = vmatpush1.msra.mxu0 0.0
    %423 = vmatprep.subr.mxu0 0.0
    %424 = vmatpush1.msra.mxu0 0.0
    %425 = vmatprep.subr.mxu0 0.0
    %426 = vmatpush1.msra.mxu0 0.0
    %427 = vmatprep.subr.mxu0 0.0
    %428 = vmatpush1.msra.mxu0 0.0
    %429 = vmatprep.mubr.f32.mxu0 0.0
    %430 = vmatmul.mubr.f32.gmra.mrb[0].mxu0 %v326
    %v431 = vpop.f32.mrb[0].mxu0
    %v432 = vadd.f32 %v363, %v431
    %v433 = vpop.f32.mrb[0].mxu0
    %434 = vmatprep.mubr.f32.mxu0 0.0
    %435 = vmatmul.mubr.f32.gmra.mrb[0].mxu0 %v327
    %v436 = vpop.f32.mrb[0].mxu0
    %v437 = vadd.f32 %v363, %v436
    %v438 = vpop.f32.mrb[0].mxu0
    %439 = vmatprep.mubr.f32.mxu0 0.0
    %440 = vmatmul.mubr.f32.gmra.mrb[0].mxu0 %v328
    %v441 = vpop.f32.mrb[0].mxu0
    %v442 = vadd.f32 %v363, %v441
    %v443 = vpop.f32.mrb[0].mxu0
    %444 = vmatprep.mubr.f32.mxu0 0.0
    %445 = vmatmul.mubr.f32.gmra.mrb[0].mxu0 %v329
    %v446 = vpop.f32.mrb[0].mxu0
    %v447 = vadd.f32 %v363, %v446
    %v448 = vpop.f32.mrb[0].mxu0
    %449 = vmatprep.mubr.f32.mxu0 0.0
    %450 = vmatmul.mubr.f32.gmra.mrb[0].mxu0 %v330
    %v451 = vpop.f32.mrb[0].mxu0
    %v452 = vadd.f32 %v363, %v451
    %v453 = vpop.f32.mrb[0].mxu0
    %454 = vmatprep.mubr.f32.mxu0 0.0
    %455 = vmatmul.mubr.f32.gmra.mrb[0].mxu0 %v331
    %v456 = vpop.f32.mrb[0].mxu0
    %v457 = vadd.f32 %v363, %v456
    %v458 = vpop.f32.mrb[0].mxu0
    %459 = vmatprep.mubr.f32.mxu0 0.0
    %460 = vmatmul.mubr.f32.gmra.mrb[0].mxu0 %v332
    %v461 = vpop.f32.mrb[0].mxu0
    %v462 = vadd.f32 %v363, %v461
    %v463 = vpop.f32.mrb[0].mxu0
    %464 = vmatprep.mubr.f32.mxu0 0.0
    %465 = vmatmul.mubr.f32.gmra.mrb[0].mxu0 %v333
    %v466 = vpop.f32.mrb[0].mxu0
    %v467 = vadd.f32 %v363, %v466
    %v468 = vpop.f32.mrb[0].mxu0
    %469 = vmatprep.mubr.f32.mxu0 0.0
    %470 = vmatmul.mubr.f32.gmra.mrb[0].mxu0 %v334
    %v471 = vpop.f32.mrb[0].mxu0
    %v472 = vadd.f32 %v363, %v471
    %v473 = vpop.f32.mrb[0].mxu0
    %474 = vmatprep.mubr.f32.mxu0 0.0
    %475 = vmatmul.mubr.f32.gmra.mrb[0].mxu0 %v335
    %v476 = vpop.f32.mrb[0].mxu0
    %v477 = vadd.f32 %v363, %v476
    %v478 = vpop.f32.mrb[0].mxu0
    %479 = vmatprep.mubr.f32.mxu0 0.0
    %480 = vmatmul.mubr.f32.gmra.mrb[0].mxu0 %v336
    %v481 = vpop.f32.mrb[0].mxu0
    %v482 = vadd.f32 %v363, %v481
    %v483 = vpop.f32.mrb[0].mxu0
    %484 = vmatprep.mubr.f32.mxu0 0.0
    %485 = vmatmul.mubr.f32.gmra.mrb[0].mxu0 %v337
    %v486 = vpop.f32.mrb[0].mxu0
    %v487 = vadd.f32 %v363, %v486
    %v488 = vpop.f32.mrb[0].mxu0
    %489 = vmatprep.mubr.f32.mxu0 0.0
    %490 = vmatmul.mubr.f32.gmra.mrb[0].mxu0 %v338
    %v491 = vpop.f32.mrb[0].mxu0
    %v492 = vadd.f32 %v363, %v491
    %v493 = vpop.f32.mrb[0].mxu0
    %494 = vmatprep.mubr.f32.mxu0 0.0
    %495 = vmatmul.mubr.f32.gmra.mrb[0].mxu0 %v339
    %v496 = vpop.f32.mrb[0].mxu0
    %v497 = vadd.f32 %v363, %v496
    %v498 = vpop.f32.mrb[0].mxu0
    %499 = vmatprep.mubr.f32.mxu0 0.0
    %500 = vmatmul.mubr.f32.gmra.mrb[0].mxu0 %v340
    %v501 = vpop.f32.mrb[0].mxu0
    %v502 = vadd.f32 %v363, %v501
    %v503 = vpop.f32.mrb[0].mxu0
    %504 = vmatprep.mubr.f32.mxu0 0.0
    %505 = vmatmul.mubr.f32.gmra.mrb[0].mxu0 %v341
    %v506 = vpop.f32.mrb[0].mxu0
    %v507 = vadd.f32 %v363, %v506
    %v508 = vpop.f32.mrb[0].mxu0
    %509 = vdwg.mxu0
    %v510 = vadd.f32 %v310, %v432
    %v511 = vadd.f32 %v311, %v437
    %v512 = vadd.f32 %v312, %v442
    %v513 = vadd.f32 %v313, %v447
    %v514 = vadd.f32 %v314, %v452
    %v515 = vadd.f32 %v315, %v457
    %v516 = vadd.f32 %v316, %v462
    %v517 = vadd.f32 %v317, %v467
    %v518 = vadd.f32 %v318, %v472
    %v519 = vadd.f32 %v319, %v477
    %v520 = vadd.f32 %v320, %v482
    %v521 = vadd.f32 %v321, %v487
    %v522 = vadd.f32 %v322, %v492
    %v523 = vadd.f32 %v323, %v497
    %v524 = vadd.f32 %v324, %v502
    %v525 = vadd.f32 %v325, %v507
    %v526 = vmax.f32 %v510, 0.0
    %v527 = vmax.f32 %v511, 0.0
    %v528 = vmax.f32 %v512, 0.0
    %v529 = vmax.f32 %v513, 0.0
    %v530 = vmax.f32 %v514, 0.0
    %v531 = vmax.f32 %v515, 0.0
    %v532 = vmax.f32 %v516, 0.0
    %v533 = vmax.f32 %v517, 0.0
    %v534 = vmax.f32 %v518, 0.0
    %v535 = vmax.f32 %v519, 0.0
    %v536 = vmax.f32 %v520, 0.0
    %v537 = vmax.f32 %v521, 0.0
    %v538 = vmax.f32 %v522, 0.0
    %v539 = vmax.f32 %v523, 0.0
    %v540 = vmax.f32 %v524, 0.0
    %v541 = vmax.f32 %v525, 0.0
    %542 = vst [vmem:[%s6] sm:$0xff] %v526
    %543 = vst [vmem:[%s6 + $0x8] sm:$0xff] %v527
    %544 = vst [vmem:[%s6 + $0x10] sm:$0xff] %v528
    %545 = vst [vmem:[%s6 + $0x18] sm:$0xff] %v529
    %546 = vst [vmem:[%s6 + $0x20] sm:$0xff] %v530
    %547 = vst [vmem:[%s6 + $0x28] sm:$0xff] %v531
    %548 = vst [vmem:[%s6 + $0x30] sm:$0xff] %v532
    %549 = vst [vmem:[%s6 + $0x38] sm:$0xff] %v533
    %550 = vst [vmem:[%s6 + $0x40] sm:$0xff] %v534
    %551 = vst [vmem:[%s6 + $0x48] sm:$0xff] %v535
    %552 = vst [vmem:[%s6 + $0x50] sm:$0xff] %v536
    %553 = vst [vmem:[%s6 + $0x58] sm:$0xff] %v537
    %554 = vst [vmem:[%s6 + $0x60] sm:$0xff] %v538
    %555 = vst [vmem:[%s6 + $0x68] sm:$0xff] %v539
    %556 = vst [vmem:[%s6 + $0x70] sm:$0xff] %v540
    %557 = vst [vmem:[%s6 + $0x78] sm:$0xff] %v541
  $region33: #{_lambda_.5} parent=0 // pred_fallthru
    _
  // Predicated region
  $region34: #{_lambda_.5} parent=0 // pred_check
    _
  $region35: #{_lambda_.5} parent=0 // pred_check_branch
    %559 = sbr.rel (0) target = $region37
  $region36: #{_lambda_.5} parent=0 // pred_region
    _
  $region37: #{_lambda_.5} parent=0 // pred_fallthru
    _
  // Predicated region
  $region38: #{_lambda_.5} parent=0 // pred_check
    _
  $region39: #{_lambda_.5} parent=0 // pred_check_branch
    %561 = sbr.rel (0) target = $region41
  $region40: #{_lambda_.5} parent=0 // pred_region
    _
  $region41: #{_lambda_.5} parent=0 // pred_fallthru
    _

// kernel: _lambda_.4
$region0: #{_lambda_.4}
  #allocation0 [shape = 'u32[]', space=smem, size = 0x4, offset = 0x4, fixed_abs, tag = 'smem constant byte address 0x4 - core index']
  #allocation1 [shape = 'u32[144,128]{1,0:T(1,128)}', space=vmem, size = 0x12000, scoped, tag = 'internal scratch']
  %s0 = inlined_call_operand.vmem [shape: f32[2,10,10,128], index: 0, kind: input, shape index: {}]
  %s1 = inlined_call_operand.vmem [shape: f32[3,3,128,128], index: 1, kind: input, shape index: {}]
  %s2 = inlined_call_operand.vmem [shape: f32[1,128], index: 2, kind: input, shape index: {}]
  %s3 = inlined_call_operand.vmem [shape: f32[2,64,128], index: 3, kind: output, shape index: {}]
  %s4 = sld [smem:[#allocation0]]
  $region45: #{_lambda_.4} parent=0
    _
  %s6 = ssub.s32 1, %s4
  %s7 = scalar_select 0, %s6, %s4
  loop: start=0, step=1, limit=4
  $region2: #{_lambda_.4} parent=0 // loop_pre_header
    _
  $region3: #{_lambda_.4} parent=0 // loop_header
    %s9 = sphi 0, %s13
    %p10 = scmp.ge.s32.totalorder %s9, 4
    %s19 = sphi 0, %s21
    %s22 = sphi 0, %s19
    %s23 = sphi 0, %s22
    %s39 = sphi 0, %s23
    %s43 = sphi 0, %s43
    %s45 = sphi 0, %s43
    %s46 = sphi 0, %s45
    %s60 = sphi 0, %s46
    %s64 = sphi 0, %s64
    %s66 = sphi 0, %s64
    %s67 = sphi 0, %s66
    %s81 = sphi 0, %s67
    %s87 = sphi 0, %s89
    %s90 = sphi 0, %s87
    %s91 = sphi 0, %s90
    %s107 = sphi 0, %s91
  $region4: #{_lambda_.4} parent=0 // loop_header_branch
    %12 = sbr.rel (%p10) target = $region8
  $region5: #{_lambda_.4} parent=0 // loop_body
    %s14 = ssub.s32 %s9, 1
    %s15 = ssub.s32 %s9, 2
    %s16 = sadd.s32 %s9, 1
    %s17 = ssub.s32 %s9, %s16
    %p18 = scmp.eq.s32.totalorder %s17, 0
    %s20 = sadd.s32 %s19, 1
    %s21 = scalar_select %p18, %s19, %s20
    %p24 = pneg %p18
    %p25 = scmp.eq.s32.totalorder %s9, 1
    %p26 = por %p24, %p25
    %p27 = scmp.ne.s32.totalorder %s19, %s22
    %p28 = scmp.eq.s32.totalorder %s9, 0
    %p29 = por %p27, %p28
    %p30 = scmp.ne.s32.totalorder %s19, %s22
    %p31 = scmp.eq.s32.totalorder %s14, 1
    %p32 = por %p30, %p31
    %p33 = scmp.ne.s32.totalorder %s22, %s23
    %p34 = scmp.eq.s32.totalorder %s14, 0
    %p35 = por %p33, %p34
    %p36 = scmp.ne.s32.totalorder %s22, %s23
    %p37 = scmp.eq.s32.totalorder %s15, 1
    %p38 = por %p36, %p37
    %p40 = scmp.ne.s32.totalorder %s23, %s39
    %p41 = scmp.eq.s32.totalorder %s15, 0
    %p42 = por %p40, %p41
    %s44 = sadd.s32 %s43, 1
    %p47 = scmp.eq.s32.totalorder %s9, 1
    %p48 = scmp.ne.s32.totalorder %s43, %s45
    %p49 = scmp.eq.s32.totalorder %s9, 0
    %p50 = por %p48, %p49
    %p51 = scmp.ne.s32.totalorder %s43, %s45
    %p52 = scmp.eq.s32.totalorder %s14, 1
    %p53 = por %p51, %p52
    %p54 = scmp.ne.s32.totalorder %s45, %s46
    %p55 = scmp.eq.s32.totalorder %s14, 0
    %p56 = por %p54, %p55
    %p57 = scmp.ne.s32.totalorder %s45, %s46
    %p58 = scmp.eq.s32.totalorder %s15, 1
    %p59 = por %p57, %p58
    %p61 = scmp.ne.s32.totalorder %s46, %s60
    %p62 = scmp.eq.s32.totalorder %s15, 0
    %p63 = por %p61, %p62
    %s65 = sadd.s32 %s64, 1
    %p68 = scmp.eq.s32.totalorder %s9, 1
    %p69 = scmp.ne.s32.totalorder %s64, %s66
    %p70 = scmp.eq.s32.totalorder %s9, 0
    %p71 = por %p69, %p70
    %p72 = scmp.ne.s32.totalorder %s64, %s66
    %p73 = scmp.eq.s32.totalorder %s14, 1
    %p74 = por %p72, %p73
    %p75 = scmp.ne.s32.totalorder %s66, %s67
    %p76 = scmp.eq.s32.totalorder %s14, 0
    %p77 = por %p75, %p76
    %p78 = scmp.ne.s32.totalorder %s66, %s67
    %p79 = scmp.eq.s32.totalorder %s15, 1
    %p80 = por %p78, %p79
    %p82 = scmp.ne.s32.totalorder %s67, %s81
    %p83 = scmp.eq.s32.totalorder %s15, 0
    %p84 = por %p82, %p83
    %s85 = ssub.s32 %s9, %s16
    %p86 = scmp.eq.s32.totalorder %s85, 0
    %s88 = sadd.s32 %s87, 1
    %s89 = scalar_select %p86, %s87, %s88
    %p92 = pneg %p86
    %p93 = scmp.eq.s32.totalorder %s9, 1
    %p94 = por %p92, %p93
    %p95 = scmp.ne.s32.totalorder %s87, %s90
    %p96 = scmp.eq.s32.totalorder %s9, 0
    %p97 = por %p95, %p96
    %p98 = scmp.ne.s32.totalorder %s87, %s90
    %p99 = scmp.eq.s32.totalorder %s14, 1
    %p100 = por %p98, %p99
    %p101 = scmp.ne.s32.totalorder %s90, %s91
    %p102 = scmp.eq.s32.totalorder %s14, 0
    %p103 = por %p101, %p102
    %p104 = scmp.ne.s32.totalorder %s90, %s91
    %p105 = scmp.eq.s32.totalorder %s15, 1
    %p106 = por %p104, %p105
    %p108 = scmp.ne.s32.totalorder %s91, %s107
    %p109 = scmp.eq.s32.totalorder %s15, 0
    %p110 = por %p108, %p109
    %p111 = scmp.le.s32.totalorder 1, %s9
    %p112 = scmp.lt.s32.totalorder %s9, 3
    %p113 = pnand %p111, %p112
    %p114 = pneg %p113
    // Predicated region
    $region9: #{_lambda_.4} parent=5 // pred_check
      _
    $region10: #{_lambda_.4} parent=5 // pred_check_branch
      %116 = sbr.rel (%p113) target = $region12
    $region11: #{_lambda_.4} parent=5 // pred_region
      %s117 = ssub.s32 %s9, 1
      // Predicated region
      $region13: #{_lambda_.4} parent=11 // pred_check
        %p118 = pneg %p56
      $region14: #{_lambda_.4} parent=11 // pred_check_branch
        %120 = sbr.rel (%p118) target = $region16
      $region15: #{_lambda_.4} parent=11 // pred_region
        _
      $region16: #{_lambda_.4} parent=11 // pred_fallthru
        _
      // Predicated region
      $region17: #{_lambda_.4} parent=11 // pred_check
        %p121 = pneg %p77
      $region18: #{_lambda_.4} parent=11 // pred_check_branch
        %123 = sbr.rel (%p121) target = $region20
      $region19: #{_lambda_.4} parent=11 // pred_region
        _
      $region20: #{_lambda_.4} parent=11 // pred_fallthru
        _
    $region12: #{_lambda_.4} parent=5 // pred_fallthru
      _
    %p124 = scmp.lt.s32.totalorder %s9, 2
    // Predicated region
    $region21: #{_lambda_.4} parent=5 // pred_check
      %p125 = pneg %p124
    $region22: #{_lambda_.4} parent=5 // pred_check_branch
      %127 = sbr.rel (%p125) target = $region24
    $region23: #{_lambda_.4} parent=5 // pred_region
      // Predicated region
      $region25: #{_lambda_.4} parent=23 // pred_check
        %p128 = pneg %p29
      $region26: #{_lambda_.4} parent=23 // pred_check_branch
        %130 = sbr.rel (%p128) target = $region28
      $region27: #{_lambda_.4} parent=23 // pred_region
        %p131 = scmp.lt.s32.totalorder %s9, 1
        %s132 = scalar_select %p131, %s9, 1
        %s133 = smul.addr %s132, 20
        %s134 = smul.addr %s133, 8
        %s135 = scalar_lea.vmem %s0, %s134
      $region28: #{_lambda_.4} parent=23 // pred_fallthru
        _
    $region24: #{_lambda_.4} parent=5 // pred_fallthru
      _
    %p136 = scmp.le.s32.totalorder 1, %s9
    %p137 = scmp.lt.s32.totalorder %s9, 3
    %p138 = pnand %p136, %p137
    %p139 = pneg %p138
    // Predicated region
    $region29: #{_lambda_.4} parent=5 // pred_check
      _
    $region30: #{_lambda_.4} parent=5 // pred_check_branch
      %141 = sbr.rel (%p138) target = $region32
    $region31: #{_lambda_.4} parent=5 // pred_region
      %s142 = ssub.s32 %s9, 1
      %p143 = scmp.lt.s32.totalorder %s14, 1
      %s144 = scalar_select %p143, %s14, 1
      %s145 = smul.addr %s144, 20
      %s146 = smul.addr %s145, 8
      %s147 = scalar_lea.vmem %s0, %s146
      %p148 = pneg %p35
      %p149 = pneg %p32
      %p150 = pneg %p56
      %p151 = pneg %p53
      %p152 = pneg %p77
      %p153 = pneg %p74
      %p154 = pneg %p103
      %p155 = pneg %p100
      %p156 = scmp.lt.s32.totalorder %s14, 1
      %s157 = scalar_select %p156, %s14, 1
      %s158 = smul.addr %s157, 8
      %s159 = smul.addr %s158, 8
      %s160 = scalar_lea.vmem %s3, %s159
      %p161 = scmp.lt.s32.totalorder %s14, 1
      %s162 = scalar_select %p161, %s14, 1
      %s163 = smul.addr %s162, 20
      %s164 = smul.addr %s163, 8
      %s165 = scalar_lea.vmem %s0, %s164
      %p166 = scmp.lt.s32.totalorder %s14, 1
      %s167 = scalar_select %p166, %s14, 1
      %s168 = smul.addr %s167, 8
      %s169 = smul.addr %s168, 8
      %s170 = scalar_lea.vmem %s3, %s169
      %v171 = vld [vmem:[%s165] sm:$0xff]
      %v172 = vld [vmem:[%s165 + $0x10] sm:$0xff]
      %v173 = vld [vmem:[%s165 + $0x20] sm:$0xff]
      %v174 = vld [vmem:[%s165 + $0x30] sm:$0xff]
      %v175 = vld [vmem:[%s165 + $0x40] sm:$0xff]
      %v176 = vld [vmem:[%s165 + $0x50] sm:$0xff]
      %v177 = vld [vmem:[%s165 + $0x60] sm:$0xff]
      %v178 = vld [vmem:[%s165 + $0x70] sm:$0xff]
      %v179 = vld [vmem:[%s165 + $0x80] sm:$0xff]
      %v180 = vld [vmem:[%s165 + $0x90] sm:$0xff]
      %v181 = vld [vmem:[%s1] sm:$0xff]
      %v182 = vld [vmem:[%s1 + $0x8] sm:$0xff]
      %v183 = vld [vmem:[%s1 + $0x10] sm:$0xff]
      %v184 = vld [vmem:[%s1 + $0x18] sm:$0xff]
      %v185 = vld [vmem:[%s1 + $0x20] sm:$0xff]
      %v186 = vld [vmem:[%s1 + $0x28] sm:$0xff]
      %v187 = vld [vmem:[%s1 + $0x30] sm:$0xff]
      %v188 = vld [vmem:[%s1 + $0x38] sm:$0xff]
      %v189 = vld [vmem:[%s1 + $0x40] sm:$0xff]
      %v190 = vld [vmem:[%s1 + $0x48] sm:$0xff]
      %v191 = vld [vmem:[%s1 + $0x50] sm:$0xff]
      %v192 = vld [vmem:[%s1 + $0x58] sm:$0xff]
      %v193 = vld [vmem:[%s1 + $0x60] sm:$0xff]
      %v194 = vld [vmem:[%s1 + $0x68] sm:$0xff]
      %v195 = vld [vmem:[%s1 + $0x70] sm:$0xff]
      %v196 = vld [vmem:[%s1 + $0x78] sm:$0xff]
      %s197 = scalar_lea.vmem %s1, 384
      %v198 = vld [vmem:[%s197] sm:$0xff]
      %v199 = vld [vmem:[%s197 + $0x8] sm:$0xff]
      %v200 = vld [vmem:[%s197 + $0x10] sm:$0xff]
      %v201 = vld [vmem:[%s197 + $0x18] sm:$0xff]
      %v202 = vld [vmem:[%s197 + $0x20] sm:$0xff]
      %v203 = vld [vmem:[%s197 + $0x28] sm:$0xff]
      %v204 = vld [vmem:[%s197 + $0x30] sm:$0xff]
      %v205 = vld [vmem:[%s197 + $0x38] sm:$0xff]
      %v206 = vld [vmem:[%s197 + $0x40] sm:$0xff]
      %v207 = vld [vmem:[%s197 + $0x48] sm:$0xff]
      %v208 = vld [vmem:[%s197 + $0x50] sm:$0xff]
      %v209 = vld [vmem:[%s197 + $0x58] sm:$0xff]
      %v210 = vld [vmem:[%s197 + $0x60] sm:$0xff]
      %v211 = vld [vmem:[%s197 + $0x68] sm:$0xff]
      %v212 = vld [vmem:[%s197 + $0x70] sm:$0xff]
      %v213 = vld [vmem:[%s197 + $0x78] sm:$0xff]
      %214 = vmatprep.subr.mxu0 0.0
      %215 = vmatpush1.msra.mxu0 %v198
      %216 = vmatprep.subr.mxu0 0.0
      %217 = vmatpush1.msra.mxu0 %v199
      %218 = vmatprep.subr.mxu0 0.0
      %219 = vmatpush1.msra.mxu0 %v200
      %220 = vmatprep.subr.mxu0 0.0
      %221 = vmatpush1.msra.mxu0 %v201
      %222 = vmatprep.subr.mxu0 0.0
      %223 = vmatpush1.msra.mxu0 %v202
      %224 = vmatprep.subr.mxu0 0.0
      %225 = vmatpush1.msra.mxu0 %v203
      %226 = vmatprep.subr.mxu0 0.0
      %227 = vmatpush1.msra.mxu0 %v204
      %228 = vmatprep.subr.mxu0 0.0
      %229 = vmatpush1.msra.mxu0 %v205
      %230 = vmatprep.subr.mxu0 0.0
      %231 = vmatpush1.msra.mxu0 %v206
      %232 = vmatprep.subr.mxu0 0.0
      %233 = vmatpush1.msra.mxu0 %v207
      %234 = vmatprep.subr.mxu0 0.0
      %235 = vmatpush1.msra.mxu0 %v208
      %236 = vmatprep.subr.mxu0 0.0
      %237 = vmatpush1.msra.mxu0 %v209
      %238 = vmatprep.subr.mxu0 0.0
      %239 = vmatpush1.msra.mxu0 %v210
      %240 = vmatprep.subr.mxu0 0.0
      %241 = vmatpush1.msra.mxu0 %v211
      %242 = vmatprep.subr.mxu0 0.0
      %243 = vmatpush1.msra.mxu0 %v212
      %244 = vmatprep.subr.mxu0 0.0
      %245 = vmatpush1.msra.mxu0 %v213
      %246 = vmatprep.subr.mxu0 0.0
      %247 = vmatpush1.msra.mxu0 0.0
      %248 = vmatprep.subr.mxu0 0.0
      %249 = vmatpush1.msra.mxu0 0.0
      %250 = vmatprep.subr.mxu0 0.0
      %251 = vmatpush1.msra.mxu0 0.0
      %252 = vmatprep.subr.mxu0 0.0
      %253 = vmatpush1.msra.mxu0 0.0
      %254 = vmatprep.subr.mxu0 0.0
      %255 = vmatpush1.msra.mxu0 0.0
      %256 = vmatprep.subr.mxu0 0.0
      %257 = vmatpush1.msra.mxu0 0.0
      %258 = vmatprep.subr.mxu0 0.0
      %259 = vmatpush1.msra.mxu0 0.0
      %260 = vmatprep.subr.mxu0 0.0
      %261 = vmatpush1.msra.mxu0 0.0
      %262 = vmatprep.subr.mxu0 0.0
      %263 = vmatpush1.msra.mxu0 0.0
      %264 = vmatprep.subr.mxu0 0.0
      %265 = vmatpush1.msra.mxu0 0.0
      %266 = vmatprep.subr.mxu0 0.0
      %267 = vmatpush1.msra.mxu0 0.0
      %268 = vmatprep.subr.mxu0 0.0
      %269 = vmatpush1.msra.mxu0 0.0
      %270 = vmatprep.subr.mxu0 0.0
      %271 = vmatpush1.msra.mxu0 0.0
      %272 = vmatprep.subr.mxu0 0.0
      %273 = vmatpush1.msra.mxu0 0.0
      %274 = vmatprep.subr.mxu0 0.0
      %275 = vmatpush1.msra.mxu0 0.0
      %276 = vmatprep.subr.mxu0 0.0
      %277 = vmatpush1.msra.mxu0 0.0
      %278 = vmatprep.mubr.f32.mxu0 0.0
      %279 = vmatmul.mubr.f32.gmra.mrb[0].mxu0 %v172
      %v280 = vpop.f32.mrb[0].mxu0
      %v281 = vadd.f32 0.0, %v280
      %v282 = vpop.f32.mrb[0].mxu0
      %283 = vmatprep.mubr.f32.mxu0 0.0
      %284 = vmatmul.mubr.f32.gmra.mrb[0].mxu0 %v173
      %v285 = vpop.f32.mrb[0].mxu0
      %v286 = vadd.f32 0.0, %v285
      %v287 = vpop.f32.mrb[0].mxu0
      %288 = vmatprep.mubr.f32.mxu0 0.0
      %289 = vmatmul.mubr.f32.gmra.mrb[0].mxu0 %v174
      %v290 = vpop.f32.mrb[0].mxu0
      %v291 = vadd.f32 0.0, %v290
      %v292 = vpop.f32.mrb[0].mxu0
      %293 = vmatprep.mubr.f32.mxu0 0.0
      %294 = vmatmul.mubr.f32.gmra.mrb[0].mxu0 %v175
      %v295 = vpop.f32.mrb[0].mxu0
      %v296 = vadd.f32 0.0, %v295
      %v297 = vpop.f32.mrb[0].mxu0
      %298 = vmatprep.mubr.f32.mxu0 0.0
      %299 = vmatmul.mubr.f32.gmra.mrb[0].mxu0 %v176
      %v300 = vpop.f32.mrb[0].mxu0
      %v301 = vadd.f32 0.0, %v300
      %v302 = vpop.f32.mrb[0].mxu0
      %303 = vmatprep.mubr.f32.mxu0 0.0
      %304 = vmatmul.mubr.f32.gmra.mrb[0].mxu0 %v177
      %v305 = vpop.f32.mrb[0].mxu0
      %v306 = vadd.f32 0.0, %v305
      %v307 = vpop.f32.mrb[0].mxu0
      %308 = vmatprep.mubr.f32.mxu0 0.0
      %309 = vmatmul.mubr.f32.gmra.mrb[0].mxu0 %v178
      %v310 = vpop.f32.mrb[0].mxu0
      %v311 = vadd.f32 0.0, %v310
      %v312 = vpop.f32.mrb[0].mxu0
      %313 = vmatprep.mubr.f32.mxu0 0.0
      %314 = vmatmul.mubr.f32.gmra.mrb[0].mxu0 %v179
      %v315 = vpop.f32.mrb[0].mxu0
      %v316 = vadd.f32 0.0, %v315
      %v317 = vpop.f32.mrb[0].mxu0
      %318 = vdwg.mxu0
      %319 = vmatprep.subr.mxu0 0.0
      %320 = vmatpush1.msra.mxu0 %v181
      %321 = vmatprep.subr.mxu0 0.0
      %322 = vmatpush1.msra.mxu0 %v182
      %323 = vmatprep.subr.mxu0 0.0
      %324 = vmatpush1.msra.mxu0 %v183
      %325 = vmatprep.subr.mxu0 0.0
      %326 = vmatpush1.msra.mxu0 %v184
      %327 = vmatprep.subr.mxu0 0.0
      %328 = vmatpush1.msra.mxu0 %v185
      %329 = vmatprep.subr.mxu0 0.0
      %330 = vmatpush1.msra.mxu0 %v186
      %331 = vmatprep.subr.mxu0 0.0
      %332 = vmatpush1.msra.mxu0 %v187
      %333 = vmatprep.subr.mxu0 0.0
      %334 = vmatpush1.msra.mxu0 %v188
      %335 = vmatprep.subr.mxu0 0.0
      %336 = vmatpush1.msra.mxu0 %v189
      %337 = vmatprep.subr.mxu0 0.0
      %338 = vmatpush1.msra.mxu0 %v190
      %339 = vmatprep.subr.mxu0 0.0
      %340 = vmatpush1.msra.mxu0 %v191
      %341 = vmatprep.subr.mxu0 0.0
      %342 = vmatpush1.msra.mxu0 %v192
      %343 = vmatprep.subr.mxu0 0.0
      %344 = vmatpush1.msra.mxu0 %v193
      %345 = vmatprep.subr.mxu0 0.0
      %346 = vmatpush1.msra.mxu0 %v194
      %347 = vmatprep.subr.mxu0 0.0
      %348 = vmatpush1.msra.mxu0 %v195
      %349 = vmatprep.subr.mxu0 0.0
      %350 = vmatpush1.msra.mxu0 %v196
      %351 = vmatprep.subr.mxu0 0.0
      %352 = vmatpush1.msra.mxu0 0.0
      %353 = vmatprep.subr.mxu0 0.0
      %354 = vmatpush1.msra.mxu0 0.0
      %355 = vmatprep.subr.mxu0 0.0
      %356 = vmatpush1.msra.mxu0 0.0
      %357 = vmatprep.subr.mxu0 0.0
      %358 = vmatpush1.msra.mxu0 0.0
      %359 = vmatprep.subr.mxu0 0.0
      %360 = vmatpush1.msra.mxu0 0.0
      %361 = vmatprep.subr.mxu0 0.0
      %362 = vmatpush1.msra.mxu0 0.0
      %363 = vmatprep.subr.mxu0 0.0
      %364 = vmatpush1.msra.mxu0 0.0
      %365 = vmatprep.subr.mxu0 0.0
      %366 = vmatpush1.msra.mxu0 0.0
      %367 = vmatprep.subr.mxu0 0.0
      %368 = vmatpush1.msra.mxu0 0.0
      %369 = vmatprep.subr.mxu0 0.0
      %370 = vmatpush1.msra.mxu0 0.0
      %371 = vmatprep.subr.mxu0 0.0
      %372 = vmatpush1.msra.mxu0 0.0
      %373 = vmatprep.subr.mxu0 0.0
      %374 = vmatpush1.msra.mxu0 0.0
      %375 = vmatprep.subr.mxu0 0.0
      %376 = vmatpush1.msra.mxu0 0.0
      %377 = vmatprep.subr.mxu0 0.0
      %378 = vmatpush1.msra.mxu0 0.0
      %379 = vmatprep.subr.mxu0 0.0
      %380 = vmatpush1.msra.mxu0 0.0
      %381 = vmatprep.subr.mxu0 0.0
      %382 = vmatpush1.msra.mxu0 0.0
      %383 = vmatprep.mubr.f32.mxu0 0.0
      %384 = vmatmul.mubr.f32.gmra.mrb[0].mxu0 %v171
      %v385 = vpop.f32.mrb[0].mxu0
      %v386 = vadd.f32 %v281, %v385
      %v387 = vpop.f32.mrb[0].mxu0
      %388 = vmatprep.mubr.f32.mxu0 0.0
      %389 = vmatmul.mubr.f32.gmra.mrb[0].mxu0 %v172
      %v390 = vpop.f32.mrb[0].mxu0
      %v391 = vadd.f32 %v286, %v390
      %v392 = vpop.f32.mrb[0].mxu0
      %393 = vmatprep.mubr.f32.mxu0 0.0
      %394 = vmatmul.mubr.f32.gmra.mrb[0].mxu0 %v173
      %v395 = vpop.f32.mrb[0].mxu0
      %v396 = vadd.f32 %v291, %v395
      %v397 = vpop.f32.mrb[0].mxu0
      %398 = vmatprep.mubr.f32.mxu0 0.0
      %399 = vmatmul.mubr.f32.gmra.mrb[0].mxu0 %v174
      %v400 = vpop.f32.mrb[0].mxu0
      %v401 = vadd.f32 %v296, %v400
      %v402 = vpop.f32.mrb[0].mxu0
      %403 = vmatprep.mubr.f32.mxu0 0.0
      %404 = vmatmul.mubr.f32.gmra.mrb[0].mxu0 %v175
      %v405 = vpop.f32.mrb[0].mxu0
      %v406 = vadd.f32 %v301, %v405
      %v407 = vpop.f32.mrb[0].mxu0
      %408 = vmatprep.mubr.f32.mxu0 0.0
      %409 = vmatmul.mubr.f32.gmra.mrb[0].mxu0 %v176
      %v410 = vpop.f32.mrb[0].mxu0
      %v411 = vadd.f32 %v306, %v410
      %v412 = vpop.f32.mrb[0].mxu0
      %413 = vmatprep.mubr.f32.mxu0 0.0
      %414 = vmatmul.mubr.f32.gmra.mrb[0].mxu0 %v177
      %v415 = vpop.f32.mrb[0].mxu0
      %v416 = vadd.f32 %v311, %v415
      %v417 = vpop.f32.mrb[0].mxu0
      %418 = vmatprep.mubr.f32.mxu0 0.0
      %419 = vmatmul.mubr.f32.gmra.mrb[0].mxu0 %v178
      %v420 = vpop.f32.mrb[0].mxu0
      %v421 = vadd.f32 %v316, %v420
      %v422 = vpop.f32.mrb[0].mxu0
      %423 = vdwg.mxu0
      %s424 = scalar_lea.vmem %s1, 768
      %v425 = vld [vmem:[%s424] sm:$0xff]
      %v426 = vld [vmem:[%s424 + $0x8] sm:$0xff]
      %v427 = vld [vmem:[%s424 + $0x10] sm:$0xff]
      %v428 = vld [vmem:[%s424 + $0x18] sm:$0xff]
      %v429 = vld [vmem:[%s424 + $0x20] sm:$0xff]
      %v430 = vld [vmem:[%s424 + $0x28] sm:$0xff]
      %v431 = vld [vmem:[%s424 + $0x30] sm:$0xff]
      %v432 = vld [vmem:[%s424 + $0x38] sm:$0xff]
      %v433 = vld [vmem:[%s424 + $0x40] sm:$0xff]
      %v434 = vld [vmem:[%s424 + $0x48] sm:$0xff]
      %v435 = vld [vmem:[%s424 + $0x50] sm:$0xff]
      %v436 = vld [vmem:[%s424 + $0x58] sm:$0xff]
      %v437 = vld [vmem:[%s424 + $0x60] sm:$0xff]
      %v438 = vld [vmem:[%s424 + $0x68] sm:$0xff]
      %v439 = vld [vmem:[%s424 + $0x70] sm:$0xff]
      %v440 = vld [vmem:[%s424 + $0x78] sm:$0xff]
      %441 = vmatprep.subr.mxu0 0.0
      %442 = vmatpush1.msra.mxu0 %v425
      %443 = vmatprep.subr.mxu0 0.0
      %444 = vmatpush1.msra.mxu0 %v426
      %445 = vmatprep.subr.mxu0 0.0
      %446 = vmatpush1.msra.mxu0 %v427
      %447 = vmatprep.subr.mxu0 0.0
      %448 = vmatpush1.msra.mxu0 %v428
      %449 = vmatprep.subr.mxu0 0.0
      %450 = vmatpush1.msra.mxu0 %v429
      %451 = vmatprep.subr.mxu0 0.0
      %452 = vmatpush1.msra.mxu0 %v430
      %453 = vmatprep.subr.mxu0 0.0
      %454 = vmatpush1.msra.mxu0 %v431
      %455 = vmatprep.subr.mxu0 0.0
      %456 = vmatpush1.msra.mxu0 %v432
      %457 = vmatprep.subr.mxu0 0.0
      %458 = vmatpush1.msra.mxu0 %v433
      %459 = vmatprep.subr.mxu0 0.0
      %460 = vmatpush1.msra.mxu0 %v434
      %461 = vmatprep.subr.mxu0 0.0
      %462 = vmatpush1.msra.mxu0 %v435
      %463 = vmatprep.subr.mxu0 0.0
      %464 = vmatpush1.msra.mxu0 %v436
      %465 = vmatprep.subr.mxu0 0.0
      %466 = vmatpush1.msra.mxu0 %v437
      %467 = vmatprep.subr.mxu0 0.0
      %468 = vmatpush1.msra.mxu0 %v438
      %469 = vmatprep.subr.mxu0 0.0
      %470 = vmatpush1.msra.mxu0 %v439
      %471 = vmatprep.subr.mxu0 0.0
      %472 = vmatpush1.msra.mxu0 %v440
      %473 = vmatprep.subr.mxu0 0.0
      %474 = vmatpush1.msra.mxu0 0.0
      %475 = vmatprep.subr.mxu0 0.0
      %476 = vmatpush1.msra.mxu0 0.0
      %477 = vmatprep.subr.mxu0 0.0
      %478 = vmatpush1.msra.mxu0 0.0
      %479 = vmatprep.subr.mxu0 0.0
      %480 = vmatpush1.msra.mxu0 0.0
      %481 = vmatprep.subr.mxu0 0.0
      %482 = vmatpush1.msra.mxu0 0.0
      %483 = vmatprep.subr.mxu0 0.0
      %484 = vmatpush1.msra.mxu0 0.0
      %485 = vmatprep.subr.mxu0 0.0
      %486 = vmatpush1.msra.mxu0 0.0
      %487 = vmatprep.subr.mxu0 0.0
      %488 = vmatpush1.msra.mxu0 0.0
      %489 = vmatprep.subr.mxu0 0.0
      %490 = vmatpush1.msra.mxu0 0.0
      %491 = vmatprep.subr.mxu0 0.0
      %492 = vmatpush1.msra.mxu0 0.0
      %493 = vmatprep.subr.mxu0 0.0
      %494 = vmatpush1.msra.mxu0 0.0
      %495 = vmatprep.subr.mxu0 0.0
      %496 = vmatpush1.msra.mxu0 0.0
      %497 = vmatprep.subr.mxu0 0.0
      %498 = vmatpush1.msra.mxu0 0.0
      %499 = vmatprep.subr.mxu0 0.0
      %500 = vmatpush1.msra.mxu0 0.0
      %501 = vmatprep.subr.mxu0 0.0
      %502 = vmatpush1.msra.mxu0 0.0
      %503 = vmatprep.subr.mxu0 0.0
      %504 = vmatpush1.msra.mxu0 0.0
      %505 = vmatprep.mubr.f32.mxu0 0.0
      %506 = vmatmul.mubr.f32.gmra.mrb[0].mxu0 %v173
      %v507 = vpop.f32.mrb[0].mxu0
      %v508 = vadd.f32 0.0, %v507
      %v509 = vpop.f32.mrb[0].mxu0
      %510 = vmatprep.mubr.f32.mxu0 0.0
      %511 = vmatmul.mubr.f32.gmra.mrb[0].mxu0 %v174
      %v512 = vpop.f32.mrb[0].mxu0
      %v513 = vadd.f32 0.0, %v512
      %v514 = vpop.f32.mrb[0].mxu0
      %515 = vmatprep.mubr.f32.mxu0 0.0
      %516 = vmatmul.mubr.f32.gmra.mrb[0].mxu0 %v175
      %v517 = vpop.f32.mrb[0].mxu0
      %v518 = vadd.f32 0.0, %v517
      %v519 = vpop.f32.mrb[0].mxu0
      %520 = vmatprep.mubr.f32.mxu0 0.0
      %521 = vmatmul.mubr.f32.gmra.mrb[0].mxu0 %v176
      %v522 = vpop.f32.mrb[0].mxu0
      %v523 = vadd.f32 0.0, %v522
      %v524 = vpop.f32.mrb[0].mxu0
      %525 = vmatprep.mubr.f32.mxu0 0.0
      %526 = vmatmul.mubr.f32.gmra.mrb[0].mxu0 %v177
      %v527 = vpop.f32.mrb[0].mxu0
      %v528 = vadd.f32 0.0, %v527
      %v529 = vpop.f32.mrb[0].mxu0
      %530 = vmatprep.mubr.f32.mxu0 0.0
      %531 = vmatmul.mubr.f32.gmra.mrb[0].mxu0 %v178
      %v532 = vpop.f32.mrb[0].mxu0
      %v533 = vadd.f32 0.0, %v532
      %v534 = vpop.f32.mrb[0].mxu0
      %535 = vmatprep.mubr.f32.mxu0 0.0
      %536 = vmatmul.mubr.f32.gmra.mrb[0].mxu0 %v179
      %v537 = vpop.f32.mrb[0].mxu0
      %v538 = vadd.f32 0.0, %v537
      %v539 = vpop.f32.mrb[0].mxu0
      %540 = vmatprep.mubr.f32.mxu0 0.0
      %541 = vmatmul.mubr.f32.gmra.mrb[0].mxu0 %v180
      %v542 = vpop.f32.mrb[0].mxu0
      %v543 = vadd.f32 0.0, %v542
      %v544 = vpop.f32.mrb[0].mxu0
      %545 = vdwg.mxu0
      %v546 = vadd.f32 %v386, %v508
      %v547 = vadd.f32 %v391, %v513
      %v548 = vadd.f32 %v396, %v518
      %v549 = vadd.f32 %v401, %v523
      %v550 = vadd.f32 %v406, %v528
      %v551 = vadd.f32 %v411, %v533
      %v552 = vadd.f32 %v416, %v538
      %v553 = vadd.f32 %v421, %v543
      %v554 = vld [vmem:[%s165 + $0x1] sm:$0xff]
      %v555 = vld [vmem:[%s165 + $0x11] sm:$0xff]
      %v556 = vld [vmem:[%s165 + $0x21] sm:$0xff]
      %v557 = vld [vmem:[%s165 + $0x31] sm:$0xff]
      %v558 = vld [vmem:[%s165 + $0x41] sm:$0xff]
      %v559 = vld [vmem:[%s165 + $0x51] sm:$0xff]
      %v560 = vld [vmem:[%s165 + $0x61] sm:$0xff]
      %v561 = vld [vmem:[%s165 + $0x71] sm:$0xff]
      %v562 = vld [vmem:[%s165 + $0x81] sm:$0xff]
      %v563 = vld [vmem:[%s165 + $0x91] sm:$0xff]
      %s564 = scalar_lea.vmem %s1, 128
      %v565 = vld [vmem:[%s564] sm:$0xff]
      %v566 = vld [vmem:[%s564 + $0x8] sm:$0xff]
      %v567 = vld [vmem:[%s564 + $0x10] sm:$0xff]
      %v568 = vld [vmem:[%s564 + $0x18] sm:$0xff]
      %v569 = vld [vmem:[%s564 + $0x20] sm:$0xff]
      %v570 = vld [vmem:[%s564 + $0x28] sm:$0xff]
      %v571 = vld [vmem:[%s564 + $0x30] sm:$0xff]
      %v572 = vld [vmem:[%s564 + $0x38] sm:$0xff]
      %v573 = vld [vmem:[%s564 + $0x40] sm:$0xff]
      %v574 = vld [vmem:[%s564 + $0x48] sm:$0xff]
      %v575 = vld [vmem:[%s564 + $0x50] sm:$0xff]
      %v576 = vld [vmem:[%s564 + $0x58] sm:$0xff]
      %v577 = vld [vmem:[%s564 + $0x60] sm:$0xff]
      %v578 = vld [vmem:[%s564 + $0x68] sm:$0xff]
      %v579 = vld [vmem:[%s564 + $0x70] sm:$0xff]
      %v580 = vld [vmem:[%s564 + $0x78] sm:$0xff]
      %581 = vmatprep.subr.mxu0 0.0
      %582 = vmatpush1.msra.mxu0 %v565
      %583 = vmatprep.subr.mxu0 0.0
      %584 = vmatpush1.msra.mxu0 %v566
      %585 = vmatprep.subr.mxu0 0.0
      %586 = vmatpush1.msra.mxu0 %v567
      %587 = vmatprep.subr.mxu0 0.0
      %588 = vmatpush1.msra.mxu0 %v568
      %589 = vmatprep.subr.mxu0 0.0
      %590 = vmatpush1.msra.mxu0 %v569
      %591 = vmatprep.subr.mxu0 0.0
      %592 = vmatpush1.msra.mxu0 %v570
      %593 = vmatprep.subr.mxu0 0.0
      %594 = vmatpush1.msra.mxu0 %v571
      %595 = vmatprep.subr.mxu0 0.0
      %596 = vmatpush1.msra.mxu0 %v572
      %597 = vmatprep.subr.mxu0 0.0
      %598 = vmatpush1.msra.mxu0 %v573
      %599 = vmatprep.subr.mxu0 0.0
      %600 = vmatpush1.msra.mxu0 %v574
      %601 = vmatprep.subr.mxu0 0.0
      %602 = vmatpush1.msra.mxu0 %v575
      %603 = vmatprep.subr.mxu0 0.0
      %604 = vmatpush1.msra.mxu0 %v576
      %605 = vmatprep.subr.mxu0 0.0
      %606 = vmatpush1.msra.mxu0 %v577
      %607 = vmatprep.subr.mxu0 0.0
      %608 = vmatpush1.msra.mxu0 %v578
      %609 = vmatprep.subr.mxu0 0.0
      %610 = vmatpush1.msra.mxu0 %v579
      %611 = vmatprep.subr.mxu0 0.0
      %612 = vmatpush1.msra.mxu0 %v580
      %613 = vmatprep.subr.mxu0 0.0
      %614 = vmatpush1.msra.mxu0 0.0
      %615 = vmatprep.subr.mxu0 0.0
      %616 = vmatpush1.msra.mxu0 0.0
      %617 = vmatprep.subr.mxu0 0.0
      %618 = vmatpush1.msra.mxu0 0.0
      %619 = vmatprep.subr.mxu0 0.0
      %620 = vmatpush1.msra.mxu0 0.0
      %621 = vmatprep.subr.mxu0 0.0
      %622 = vmatpush1.msra.mxu0 0.0
      %623 = vmatprep.subr.mxu0 0.0
      %624 = vmatpush1.msra.mxu0 0.0
      %625 = vmatprep.subr.mxu0 0.0
      %626 = vmatpush1.msra.mxu0 0.0
      %627 = vmatprep.subr.mxu0 0.0
      %628 = vmatpush1.msra.mxu0 0.0
      %629 = vmatprep.subr.mxu0 0.0
      %630 = vmatpush1.msra.mxu0 0.0
      %631 = vmatprep.subr.mxu0 0.0
      %632 = vmatpush1.msra.mxu0 0.0
      %633 = vmatprep.subr.mxu0 0.0
      %634 = vmatpush1.msra.mxu0 0.0
      %635 = vmatprep.subr.mxu0 0.0
      %636 = vmatpush1.msra.mxu0 0.0
      %637 = vmatprep.subr.mxu0 0.0
      %638 = vmatpush1.msra.mxu0 0.0
      %639 = vmatprep.subr.mxu0 0.0
      %640 = vmatpush1.msra.mxu0 0.0
      %641 = vmatprep.subr.mxu0 0.0
      %642 = vmatpush1.msra.mxu0 0.0
      %643 = vmatprep.subr.mxu0 0.0
      %644 = vmatpush1.msra.mxu0 0.0
      %645 = vmatprep.mubr.f32.mxu0 0.0
      %646 = vmatmul.mubr.f32.gmra.mrb[0].mxu0 %v554
      %v647 = vpop.f32.mrb[0].mxu0
      %v648 = vadd.f32 0.0, %v647
      %v649 = vpop.f32.mrb[0].mxu0
      %650 = vmatprep.mubr.f32.mxu0 0.0
      %651 = vmatmul.mubr.f32.gmra.mrb[0].mxu0 %v555
      %v652 = vpop.f32.mrb[0].mxu0
      %v653 = vadd.f32 0.0, %v652
      %v654 = vpop.f32.mrb[0].mxu0
      %655 = vmatprep.mubr.f32.mxu0 0.0
      %656 = vmatmul.mubr.f32.gmra.mrb[0].mxu0 %v556
      %v657 = vpop.f32.mrb[0].mxu0
      %v658 = vadd.f32 0.0, %v657
      %v659 = vpop.f32.mrb[0].mxu0
      %660 = vmatprep.mubr.f32.mxu0 0.0
      %661 = vmatmul.mubr.f32.gmra.mrb[0].mxu0 %v557
      %v662 = vpop.f32.mrb[0].mxu0
      %v663 = vadd.f32 0.0, %v662
      %v664 = vpop.f32.mrb[0].mxu0
      %665 = vmatprep.mubr.f32.mxu0 0.0
      %666 = vmatmul.mubr.f32.gmra.mrb[0].mxu0 %v558
      %v667 = vpop.f32.mrb[0].mxu0
      %v668 = vadd.f32 0.0, %v667
      %v669 = vpop.f32.mrb[0].mxu0
      %670 = vmatprep.mubr.f32.mxu0 0.0
      %671 = vmatmul.mubr.f32.gmra.mrb[0].mxu0 %v559
      %v672 = vpop.f32.mrb[0].mxu0
      %v673 = vadd.f32 0.0, %v672
      %v674 = vpop.f32.mrb[0].mxu0
      %675 = vmatprep.mubr.f32.mxu0 0.0
      %676 = vmatmul.mubr.f32.gmra.mrb[0].mxu0 %v560
      %v677 = vpop.f32.mrb[0].mxu0
      %v678 = vadd.f32 0.0, %v677
      %v679 = vpop.f32.mrb[0].mxu0
      %680 = vmatprep.mubr.f32.mxu0 0.0
      %681 = vmatmul.mubr.f32.gmra.mrb[0].mxu0 %v561
      %v682 = vpop.f32.mrb[0].mxu0
      %v683 = vadd.f32 0.0, %v682
      %v684 = vpop.f32.mrb[0].mxu0
      %685 = vdwg.mxu0
      %v686 = vadd.f32 %v546, %v648
      %v687 = vadd.f32 %v547, %v653
      %v688 = vadd.f32 %v548, %v658
      %v689 = vadd.f32 %v549, %v663
      %v690 = vadd.f32 %v550, %v668
      %v691 = vadd.f32 %v551, %v673
      %v692 = vadd.f32 %v552, %v678
      %v693 = vadd.f32 %v553, %v683
      %s694 = scalar_lea.vmem %s1, 512
      %v695 = vld [vmem:[%s694] sm:$0xff]
      %v696 = vld [vmem:[%s694 + $0x8] sm:$0xff]
      %v697 = vld [vmem:[%s694 + $0x10] sm:$0xff]
      %v698 = vld [vmem:[%s694 + $0x18] sm:$0xff]
      %v699 = vld [vmem:[%s694 + $0x20] sm:$0xff]
      %v700 = vld [vmem:[%s694 + $0x28] sm:$0xff]
      %v701 = vld [vmem:[%s694 + $0x30] sm:$0xff]
      %v702 = vld [vmem:[%s694 + $0x38] sm:$0xff]
      %v703 = vld [vmem:[%s694 + $0x40] sm:$0xff]
      %v704 = vld [vmem:[%s694 + $0x48] sm:$0xff]
      %v705 = vld [vmem:[%s694 + $0x50] sm:$0xff]
      %v706 = vld [vmem:[%s694 + $0x58] sm:$0xff]
      %v707 = vld [vmem:[%s694 + $0x60] sm:$0xff]
      %v708 = vld [vmem:[%s694 + $0x68] sm:$0xff]
      %v709 = vld [vmem:[%s694 + $0x70] sm:$0xff]
      %v710 = vld [vmem:[%s694 + $0x78] sm:$0xff]
      %711 = vmatprep.subr.mxu0 0.0
      %712 = vmatpush1.msra.mxu0 %v695
      %713 = vmatprep.subr.mxu0 0.0
      %714 = vmatpush1.msra.mxu0 %v696
      %715 = vmatprep.subr.mxu0 0.0
      %716 = vmatpush1.msra.mxu0 %v697
      %717 = vmatprep.subr.mxu0 0.0
      %718 = vmatpush1.msra.mxu0 %v698
      %719 = vmatprep.subr.mxu0 0.0
      %720 = vmatpush1.msra.mxu0 %v699
      %721 = vmatprep.subr.mxu0 0.0
      %722 = vmatpush1.msra.mxu0 %v700
      %723 = vmatprep.subr.mxu0 0.0
      %724 = vmatpush1.msra.mxu0 %v701
      %725 = vmatprep.subr.mxu0 0.0
      %726 = vmatpush1.msra.mxu0 %v702
      %727 = vmatprep.subr.mxu0 0.0
      %728 = vmatpush1.msra.mxu0 %v703
      %729 = vmatprep.subr.mxu0 0.0
      %730 = vmatpush1.msra.mxu0 %v704
      %731 = vmatprep.subr.mxu0 0.0
      %732 = vmatpush1.msra.mxu0 %v705
      %733 = vmatprep.subr.mxu0 0.0
      %734 = vmatpush1.msra.mxu0 %v706
      %735 = vmatprep.subr.mxu0 0.0
      %736 = vmatpush1.msra.mxu0 %v707
      %737 = vmatprep.subr.mxu0 0.0
      %738 = vmatpush1.msra.mxu0 %v708
      %739 = vmatprep.subr.mxu0 0.0
      %740 = vmatpush1.msra.mxu0 %v709
      %741 = vmatprep.subr.mxu0 0.0
      %742 = vmatpush1.msra.mxu0 %v710
      %743 = vmatprep.subr.mxu0 0.0
      %744 = vmatpush1.msra.mxu0 0.0
      %745 = vmatprep.subr.mxu0 0.0
      %746 = vmatpush1.msra.mxu0 0.0
      %747 = vmatprep.subr.mxu0 0.0
      %748 = vmatpush1.msra.mxu0 0.0
      %749 = vmatprep.subr.mxu0 0.0
      %750 = vmatpush1.msra.mxu0 0.0
      %751 = vmatprep.subr.mxu0 0.0
      %752 = vmatpush1.msra.mxu0 0.0
      %753 = vmatprep.subr.mxu0 0.0
      %754 = vmatpush1.msra.mxu0 0.0
      %755 = vmatprep.subr.mxu0 0.0
      %756 = vmatpush1.msra.mxu0 0.0
      %757 = vmatprep.subr.mxu0 0.0
      %758 = vmatpush1.msra.mxu0 0.0
      %759 = vmatprep.subr.mxu0 0.0
      %760 = vmatpush1.msra.mxu0 0.0
      %761 = vmatprep.subr.mxu0 0.0
      %762 = vmatpush1.msra.mxu0 0.0
      %763 = vmatprep.subr.mxu0 0.0
      %764 = vmatpush1.msra.mxu0 0.0
      %765 = vmatprep.subr.mxu0 0.0
      %766 = vmatpush1.msra.mxu0 0.0
      %767 = vmatprep.subr.mxu0 0.0
      %768 = vmatpush1.msra.mxu0 0.0
      %769 = vmatprep.subr.mxu0 0.0
      %770 = vmatpush1.msra.mxu0 0.0
      %771 = vmatprep.subr.mxu0 0.0
      %772 = vmatpush1.msra.mxu0 0.0
      %773 = vmatprep.subr.mxu0 0.0
      %774 = vmatpush1.msra.mxu0 0.0
      %775 = vmatprep.mubr.f32.mxu0 0.0
      %776 = vmatmul.mubr.f32.gmra.mrb[0].mxu0 %v555
      %v777 = vpop.f32.mrb[0].mxu0
      %v778 = vadd.f32 0.0, %v777
      %v779 = vpop.f32.mrb[0].mxu0
      %780 = vmatprep.mubr.f32.mxu0 0.0
      %781 = vmatmul.mubr.f32.gmra.mrb[0].mxu0 %v556
      %v782 = vpop.f32.mrb[0].mxu0
      %v783 = vadd.f32 0.0, %v782
      %v784 = vpop.f32.mrb[0].mxu0
      %785 = vmatprep.mubr.f32.mxu0 0.0
      %786 = vmatmul.mubr.f32.gmra.mrb[0].mxu0 %v557
      %v787 = vpop.f32.mrb[0].mxu0
      %v788 = vadd.f32 0.0, %v787
      %v789 = vpop.f32.mrb[0].mxu0
      %790 = vmatprep.mubr.f32.mxu0 0.0
      %791 = vmatmul.mubr.f32.gmra.mrb[0].mxu0 %v558
      %v792 = vpop.f32.mrb[0].mxu0
      %v793 = vadd.f32 0.0, %v792
      %v794 = vpop.f32.mrb[0].mxu0
      %795 = vmatprep.mubr.f32.mxu0 0.0
      %796 = vmatmul.mubr.f32.gmra.mrb[0].mxu0 %v559
      %v797 = vpop.f32.mrb[0].mxu0
      %v798 = vadd.f32 0.0, %v797
      %v799 = vpop.f32.mrb[0].mxu0
      %800 = vmatprep.mubr.f32.mxu0 0.0
      %801 = vmatmul.mubr.f32.gmra.mrb[0].mxu0 %v560
      %v802 = vpop.f32.mrb[0].mxu0
      %v803 = vadd.f32 0.0, %v802
      %v804 = vpop.f32.mrb[0].mxu0
      %805 = vmatprep.mubr.f32.mxu0 0.0
      %806 = vmatmul.mubr.f32.gmra.mrb[0].mxu0 %v561
      %v807 = vpop.f32.mrb[0].mxu0
      %v808 = vadd.f32 0.0, %v807
      %v809 = vpop.f32.mrb[0].mxu0
      %810 = vmatprep.mubr.f32.mxu0 0.0
      %811 = vmatmul.mubr.f32.gmra.mrb[0].mxu0 %v562
      %v812 = vpop.f32.mrb[0].mxu0
      %v813 = vadd.f32 0.0, %v812
      %v814 = vpop.f32.mrb[0].mxu0
      %815 = vdwg.mxu0
      %v816 = vadd.f32 %v686, %v778
      %v817 = vadd.f32 %v687, %v783
      %v818 = vadd.f32 %v688, %v788
      %v819 = vadd.f32 %v689, %v793
      %v820 = vadd.f32 %v690, %v798
      %v821 = vadd.f32 %v691, %v803
      %v822 = vadd.f32 %v692, %v808
      %v823 = vadd.f32 %v693, %v813
      %s824 = scalar_lea.vmem %s1, 896
      %v825 = vld [vmem:[%s824] sm:$0xff]
      %v826 = vld [vmem:[%s824 + $0x8] sm:$0xff]
      %v827 = vld [vmem:[%s824 + $0x10] sm:$0xff]
      %v828 = vld [vmem:[%s824 + $0x18] sm:$0xff]
      %v829 = vld [vmem:[%s824 + $0x20] sm:$0xff]
      %v830 = vld [vmem:[%s824 + $0x28] sm:$0xff]
      %v831 = vld [vmem:[%s824 + $0x30] sm:$0xff]
      %v832 = vld [vmem:[%s824 + $0x38] sm:$0xff]
      %v833 = vld [vmem:[%s824 + $0x40] sm:$0xff]
      %v834 = vld [vmem:[%s824 + $0x48] sm:$0xff]
      %v835 = vld [vmem:[%s824 + $0x50] sm:$0xff]
      %v836 = vld [vmem:[%s824 + $0x58] sm:$0xff]
      %v837 = vld [vmem:[%s824 + $0x60] sm:$0xff]
      %v838 = vld [vmem:[%s824 + $0x68] sm:$0xff]
      %v839 = vld [vmem:[%s824 + $0x70] sm:$0xff]
      %v840 = vld [vmem:[%s824 + $0x78] sm:$0xff]
      %841 = vmatprep.subr.mxu0 0.0
      %842 = vmatpush1.msra.mxu0 %v825
      %843 = vmatprep.subr.mxu0 0.0
      %844 = vmatpush1.msra.mxu0 %v826
      %845 = vmatprep.subr.mxu0 0.0
      %846 = vmatpush1.msra.mxu0 %v827
      %847 = vmatprep.subr.mxu0 0.0
      %848 = vmatpush1.msra.mxu0 %v828
      %849 = vmatprep.subr.mxu0 0.0
      %850 = vmatpush1.msra.mxu0 %v829
      %851 = vmatprep.subr.mxu0 0.0
      %852 = vmatpush1.msra.mxu0 %v830
      %853 = vmatprep.subr.mxu0 0.0
      %854 = vmatpush1.msra.mxu0 %v831
      %855 = vmatprep.subr.mxu0 0.0
      %856 = vmatpush1.msra.mxu0 %v832
      %857 = vmatprep.subr.mxu0 0.0
      %858 = vmatpush1.msra.mxu0 %v833
      %859 = vmatprep.subr.mxu0 0.0
      %860 = vmatpush1.msra.mxu0 %v834
      %861 = vmatprep.subr.mxu0 0.0
      %862 = vmatpush1.msra.mxu0 %v835
      %863 = vmatprep.subr.mxu0 0.0
      %864 = vmatpush1.msra.mxu0 %v836
      %865 = vmatprep.subr.mxu0 0.0
      %866 = vmatpush1.msra.mxu0 %v837
      %867 = vmatprep.subr.mxu0 0.0
      %868 = vmatpush1.msra.mxu0 %v838
      %869 = vmatprep.subr.mxu0 0.0
      %870 = vmatpush1.msra.mxu0 %v839
      %871 = vmatprep.subr.mxu0 0.0
      %872 = vmatpush1.msra.mxu0 %v840
      %873 = vmatprep.subr.mxu0 0.0
      %874 = vmatpush1.msra.mxu0 0.0
      %875 = vmatprep.subr.mxu0 0.0
      %876 = vmatpush1.msra.mxu0 0.0
      %877 = vmatprep.subr.mxu0 0.0
      %878 = vmatpush1.msra.mxu0 0.0
      %879 = vmatprep.subr.mxu0 0.0
      %880 = vmatpush1.msra.mxu0 0.0
      %881 = vmatprep.subr.mxu0 0.0
      %882 = vmatpush1.msra.mxu0 0.0
      %883 = vmatprep.subr.mxu0 0.0
      %884 = vmatpush1.msra.mxu0 0.0
      %885 = vmatprep.subr.mxu0 0.0
      %886 = vmatpush1.msra.mxu0 0.0
      %887 = vmatprep.subr.mxu0 0.0
      %888 = vmatpush1.msra.mxu0 0.0
      %889 = vmatprep.subr.mxu0 0.0
      %890 = vmatpush1.msra.mxu0 0.0
      %891 = vmatprep.subr.mxu0 0.0
      %892 = vmatpush1.msra.mxu0 0.0
      %893 = vmatprep.subr.mxu0 0.0
      %894 = vmatpush1.msra.mxu0 0.0
      %895 = vmatprep.subr.mxu0 0.0
      %896 = vmatpush1.msra.mxu0 0.0
      %897 = vmatprep.subr.mxu0 0.0
      %898 = vmatpush1.msra.mxu0 0.0
      %899 = vmatprep.subr.mxu0 0.0
      %900 = vmatpush1.msra.mxu0 0.0
      %901 = vmatprep.subr.mxu0 0.0
      %902 = vmatpush1.msra.mxu0 0.0
      %903 = vmatprep.subr.mxu0 0.0
      %904 = vmatpush1.msra.mxu0 0.0
      %905 = vmatprep.mubr.f32.mxu0 0.0
      %906 = vmatmul.mubr.f32.gmra.mrb[0].mxu0 %v556
      %v907 = vpop.f32.mrb[0].mxu0
      %v908 = vadd.f32 0.0, %v907
      %v909 = vpop.f32.mrb[0].mxu0
      %910 = vmatprep.mubr.f32.mxu0 0.0
      %911 = vmatmul.mubr.f32.gmra.mrb[0].mxu0 %v557
      %v912 = vpop.f32.mrb[0].mxu0
      %v913 = vadd.f32 0.0, %v912
      %v914 = vpop.f32.mrb[0].mxu0
      %915 = vmatprep.mubr.f32.mxu0 0.0
      %916 = vmatmul.mubr.f32.gmra.mrb[0].mxu0 %v558
      %v917 = vpop.f32.mrb[0].mxu0
      %v918 = vadd.f32 0.0, %v917
      %v919 = vpop.f32.mrb[0].mxu0
      %920 = vmatprep.mubr.f32.mxu0 0.0
      %921 = vmatmul.mubr.f32.gmra.mrb[0].mxu0 %v559
      %v922 = vpop.f32.mrb[0].mxu0
      %v923 = vadd.f32 0.0, %v922
      %v924 = vpop.f32.mrb[0].mxu0
      %925 = vmatprep.mubr.f32.mxu0 0.0
      %926 = vmatmul.mubr.f32.gmra.mrb[0].mxu0 %v560
      %v927 = vpop.f32.mrb[0].mxu0
      %v928 = vadd.f32 0.0, %v927
      %v929 = vpop.f32.mrb[0].mxu0
      %930 = vmatprep.mubr.f32.mxu0 0.0
      %931 = vmatmul.mubr.f32.gmra.mrb[0].mxu0 %v561
      %v932 = vpop.f32.mrb[0].mxu0
      %v933 = vadd.f32 0.0, %v932
      %v934 = vpop.f32.mrb[0].mxu0
      %935 = vmatprep.mubr.f32.mxu0 0.0
      %936 = vmatmul.mubr.f32.gmra.mrb[0].mxu0 %v562
      %v937 = vpop.f32.mrb[0].mxu0
      %v938 = vadd.f32 0.0, %v937
      %v939 = vpop.f32.mrb[0].mxu0
      %940 = vmatprep.mubr.f32.mxu0 0.0
      %941 = vmatmul.mubr.f32.gmra.mrb[0].mxu0 %v563
      %v942 = vpop.f32.mrb[0].mxu0
      %v943 = vadd.f32 0.0, %v942
      %v944 = vpop.f32.mrb[0].mxu0
      %945 = vdwg.mxu0
      %v946 = vadd.f32 %v816, %v908
      %v947 = vadd.f32 %v817, %v913
      %v948 = vadd.f32 %v818, %v918
      %v949 = vadd.f32 %v819, %v923
      %v950 = vadd.f32 %v820, %v928
      %v951 = vadd.f32 %v821, %v933
      %v952 = vadd.f32 %v822, %v938
      %v953 = vadd.f32 %v823, %v943
      %v954 = vld [vmem:[%s165 + $0x2] sm:$0xff]
      %v955 = vld [vmem:[%s165 + $0x12] sm:$0xff]
      %v956 = vld [vmem:[%s165 + $0x22] sm:$0xff]
      %v957 = vld [vmem:[%s165 + $0x32] sm:$0xff]
      %v958 = vld [vmem:[%s165 + $0x42] sm:$0xff]
      %v959 = vld [vmem:[%s165 + $0x52] sm:$0xff]
      %v960 = vld [vmem:[%s165 + $0x62] sm:$0xff]
      %v961 = vld [vmem:[%s165 + $0x72] sm:$0xff]
      %v962 = vld [vmem:[%s165 + $0x82] sm:$0xff]
      %v963 = vld [vmem:[%s165 + $0x92] sm:$0xff]
      %s964 = scalar_lea.vmem %s1, 256
      %v965 = vld [vmem:[%s964] sm:$0xff]
      %v966 = vld [vmem:[%s964 + $0x8] sm:$0xff]
      %v967 = vld [vmem:[%s964 + $0x10] sm:$0xff]
      %v968 = vld [vmem:[%s964 + $0x18] sm:$0xff]
      %v969 = vld [vmem:[%s964 + $0x20] sm:$0xff]
      %v970 = vld [vmem:[%s964 + $0x28] sm:$0xff]
      %v971 = vld [vmem:[%s964 + $0x30] sm:$0xff]
      %v972 = vld [vmem:[%s964 + $0x38] sm:$0xff]
      %v973 = vld [vmem:[%s964 + $0x40] sm:$0xff]
      %v974 = vld [vmem:[%s964 + $0x48] sm:$0xff]
      %v975 = vld [vmem:[%s964 + $0x50] sm:$0xff]
      %v976 = vld [vmem:[%s964 + $0x58] sm:$0xff]
      %v977 = vld [vmem:[%s964 + $0x60] sm:$0xff]
      %v978 = vld [vmem:[%s964 + $0x68] sm:$0xff]
      %v979 = vld [vmem:[%s964 + $0x70] sm:$0xff]
      %v980 = vld [vmem:[%s964 + $0x78] sm:$0xff]
      %981 = vmatprep.subr.mxu0 0.0
      %982 = vmatpush1.msra.mxu0 %v965
      %983 = vmatprep.subr.mxu0 0.0
      %984 = vmatpush1.msra.mxu0 %v966
      %985 = vmatprep.subr.mxu0 0.0
      %986 = vmatpush1.msra.mxu0 %v967
      %987 = vmatprep.subr.mxu0 0.0
      %988 = vmatpush1.msra.mxu0 %v968
      %989 = vmatprep.subr.mxu0 0.0
      %990 = vmatpush1.msra.mxu0 %v969
      %991 = vmatprep.subr.mxu0 0.0
      %992 = vmatpush1.msra.mxu0 %v970
      %993 = vmatprep.subr.mxu0 0.0
      %994 = vmatpush1.msra.mxu0 %v971
      %995 = vmatprep.subr.mxu0 0.0
      %996 = vmatpush1.msra.mxu0 %v972
      %997 = vmatprep.subr.mxu0 0.0
      %998 = vmatpush1.msra.mxu0 %v973
      %999 = vmatprep.subr.mxu0 0.0
      %1000 = vmatpush1.msra.mxu0 %v974
      %1001 = vmatprep.subr.mxu0 0.0
      %1002 = vmatpush1.msra.mxu0 %v975
      %1003 = vmatprep.subr.mxu0 0.0
      %1004 = vmatpush1.msra.mxu0 %v976
      %1005 = vmatprep.subr.mxu0 0.0
      %1006 = vmatpush1.msra.mxu0 %v977
      %1007 = vmatprep.subr.mxu0 0.0
      %1008 = vmatpush1.msra.mxu0 %v978
      %1009 = vmatprep.subr.mxu0 0.0
      %1010 = vmatpush1.msra.mxu0 %v979
      %1011 = vmatprep.subr.mxu0 0.0
      %1012 = vmatpush1.msra.mxu0 %v980
      %1013 = vmatprep.subr.mxu0 0.0
      %1014 = vmatpush1.msra.mxu0 0.0
      %1015 = vmatprep.subr.mxu0 0.0
      %1016 = vmatpush1.msra.mxu0 0.0
      %1017 = vmatprep.subr.mxu0 0.0
      %1018 = vmatpush1.msra.mxu0 0.0
      %1019 = vmatprep.subr.mxu0 0.0
      %1020 = vmatpush1.msra.mxu0 0.0
      %1021 = vmatprep.subr.mxu0 0.0
      %1022 = vmatpush1.msra.mxu0 0.0
      %1023 = vmatprep.subr.mxu0 0.0
      %1024 = vmatpush1.msra.mxu0 0.0
      %1025 = vmatprep.subr.mxu0 0.0
      %1026 = vmatpush1.msra.mxu0 0.0
      %1027 = vmatprep.subr.mxu0 0.0
      %1028 = vmatpush1.msra.mxu0 0.0
      %1029 = vmatprep.subr.mxu0 0.0
      %1030 = vmatpush1.msra.mxu0 0.0
      %1031 = vmatprep.subr.mxu0 0.0
      %1032 = vmatpush1.msra.mxu0 0.0
      %1033 = vmatprep.subr.mxu0 0.0
      %1034 = vmatpush1.msra.mxu0 0.0
      %1035 = vmatprep.subr.mxu0 0.0
      %1036 = vmatpush1.msra.mxu0 0.0
      %1037 = vmatprep.subr.mxu0 0.0
      %1038 = vmatpush1.msra.mxu0 0.0
      %1039 = vmatprep.subr.mxu0 0.0
      %1040 = vmatpush1.msra.mxu0 0.0
      %1041 = vmatprep.subr.mxu0 0.0
      %1042 = vmatpush1.msra.mxu0 0.0
      %1043 = vmatprep.subr.mxu0 0.0
      %1044 = vmatpush1.msra.mxu0 0.0
      %1045 = vmatprep.mubr.f32.mxu0 0.0
      %1046 = vmatmul.mubr.f32.gmra.mrb[0].mxu0 %v954
      %v1047 = vpop.f32.mrb[0].mxu0
      %v1048 = vadd.f32 0.0, %v1047
      %v1049 = vpop.f32.mrb[0].mxu0
      %1050 = vmatprep.mubr.f32.mxu0 0.0
      %1051 = vmatmul.mubr.f32.gmra.mrb[0].mxu0 %v955
      %v1052 = vpop.f32.mrb[0].mxu0
      %v1053 = vadd.f32 0.0, %v1052
      %v1054 = vpop.f32.mrb[0].mxu0
      %1055 = vmatprep.mubr.f32.mxu0 0.0
      %1056 = vmatmul.mubr.f32.gmra.mrb[0].mxu0 %v956
      %v1057 = vpop.f32.mrb[0].mxu0
      %v1058 = vadd.f32 0.0, %v1057
      %v1059 = vpop.f32.mrb[0].mxu0
      %1060 = vmatprep.mubr.f32.mxu0 0.0
      %1061 = vmatmul.mubr.f32.gmra.mrb[0].mxu0 %v957
      %v1062 = vpop.f32.mrb[0].mxu0
      %v1063 = vadd.f32 0.0, %v1062
      %v1064 = vpop.f32.mrb[0].mxu0
      %1065 = vmatprep.mubr.f32.mxu0 0.0
      %1066 = vmatmul.mubr.f32.gmra.mrb[0].mxu0 %v958
      %v1067 = vpop.f32.mrb[0].mxu0
      %v1068 = vadd.f32 0.0, %v1067
      %v1069 = vpop.f32.mrb[0].mxu0
      %1070 = vmatprep.mubr.f32.mxu0 0.0
      %1071 = vmatmul.mubr.f32.gmra.mrb[0].mxu0 %v959
      %v1072 = vpop.f32.mrb[0].mxu0
      %v1073 = vadd.f32 0.0, %v1072
      %v1074 = vpop.f32.mrb[0].mxu0
      %1075 = vmatprep.mubr.f32.mxu0 0.0
      %1076 = vmatmul.mubr.f32.gmra.mrb[0].mxu0 %v960
      %v1077 = vpop.f32.mrb[0].mxu0
      %v1078 = vadd.f32 0.0, %v1077
      %v1079 = vpop.f32.mrb[0].mxu0
      %1080 = vmatprep.mubr.f32.mxu0 0.0
      %1081 = vmatmul.mubr.f32.gmra.mrb[0].mxu0 %v961
      %v1082 = vpop.f32.mrb[0].mxu0
      %v1083 = vadd.f32 0.0, %v1082
      %v1084 = vpop.f32.mrb[0].mxu0
      %1085 = vdwg.mxu0
      %v1086 = vadd.f32 %v946, %v1048
      %v1087 = vadd.f32 %v947, %v1053
      %v1088 = vadd.f32 %v948, %v1058
      %v1089 = vadd.f32 %v949, %v1063
      %v1090 = vadd.f32 %v950, %v1068
      %v1091 = vadd.f32 %v951, %v1073
      %v1092 = vadd.f32 %v952, %v1078
      %v1093 = vadd.f32 %v953, %v1083
      %s1094 = scalar_lea.vmem %s1, 640
      %v1095 = vld [vmem:[%s1094] sm:$0xff]
      %v1096 = vld [vmem:[%s1094 + $0x8] sm:$0xff]
      %v1097 = vld [vmem:[%s1094 + $0x10] sm:$0xff]
      %v1098 = vld [vmem:[%s1094 + $0x18] sm:$0xff]
      %v1099 = vld [vmem:[%s1094 + $0x20] sm:$0xff]
      %v1100 = vld [vmem:[%s1094 + $0x28] sm:$0xff]
      %v1101 = vld [vmem:[%s1094 + $0x30] sm:$0xff]
      %v1102 = vld [vmem:[%s1094 + $0x38] sm:$0xff]
      %v1103 = vld [vmem:[%s1094 + $0x40] sm:$0xff]
      %v1104 = vld [vmem:[%s1094 + $0x48] sm:$0xff]
      %v1105 = vld [vmem:[%s1094 + $0x50] sm:$0xff]
      %v1106 = vld [vmem:[%s1094 + $0x58] sm:$0xff]
      %v1107 = vld [vmem:[%s1094 + $0x60] sm:$0xff]
      %v1108 = vld [vmem:[%s1094 + $0x68] sm:$0xff]
      %v1109 = vld [vmem:[%s1094 + $0x70] sm:$0xff]
      %v1110 = vld [vmem:[%s1094 + $0x78] sm:$0xff]
      %1111 = vmatprep.subr.mxu0 0.0
      %1112 = vmatpush1.msra.mxu0 %v1095
      %1113 = vmatprep.subr.mxu0 0.0
      %1114 = vmatpush1.msra.mxu0 %v1096
      %1115 = vmatprep.subr.mxu0 0.0
      %1116 = vmatpush1.msra.mxu0 %v1097
      %1117 = vmatprep.subr.mxu0 0.0
      %1118 = vmatpush1.msra.mxu0 %v1098
      %1119 = vmatprep.subr.mxu0 0.0
      %1120 = vmatpush1.msra.mxu0 %v1099
      %1121 = vmatprep.subr.mxu0 0.0
      %1122 = vmatpush1.msra.mxu0 %v1100
      %1123 = vmatprep.subr.mxu0 0.0
      %1124 = vmatpush1.msra.mxu0 %v1101
      %1125 = vmatprep.subr.mxu0 0.0
      %1126 = vmatpush1.msra.mxu0 %v1102
      %1127 = vmatprep.subr.mxu0 0.0
      %1128 = vmatpush1.msra.mxu0 %v1103
      %1129 = vmatprep.subr.mxu0 0.0
      %1130 = vmatpush1.msra.mxu0 %v1104
      %1131 = vmatprep.subr.mxu0 0.0
      %1132 = vmatpush1.msra.mxu0 %v1105
      %1133 = vmatprep.subr.mxu0 0.0
      %1134 = vmatpush1.msra.mxu0 %v1106
      %1135 = vmatprep.subr.mxu0 0.0
      %1136 = vmatpush1.msra.mxu0 %v1107
      %1137 = vmatprep.subr.mxu0 0.0
      %1138 = vmatpush1.msra.mxu0 %v1108
      %1139 = vmatprep.subr.mxu0 0.0
      %1140 = vmatpush1.msra.mxu0 %v1109
      %1141 = vmatprep.subr.mxu0 0.0
      %1142 = vmatpush1.msra.mxu0 %v1110
      %1143 = vmatprep.subr.mxu0 0.0
      %1144 = vmatpush1.msra.mxu0 0.0
      %1145 = vmatprep.subr.mxu0 0.0
      %1146 = vmatpush1.msra.mxu0 0.0
      %1147 = vmatprep.subr.mxu0 0.0
      %1148 = vmatpush1.msra.mxu0 0.0
      %1149 = vmatprep.subr.mxu0 0.0
      %1150 = vmatpush1.msra.mxu0 0.0
      %1151 = vmatprep.subr.mxu0 0.0
      %1152 = vmatpush1.msra.mxu0 0.0
      %1153 = vmatprep.subr.mxu0 0.0
      %1154 = vmatpush1.msra.mxu0 0.0
      %1155 = vmatprep.subr.mxu0 0.0
      %1156 = vmatpush1.msra.mxu0 0.0
      %1157 = vmatprep.subr.mxu0 0.0
      %1158 = vmatpush1.msra.mxu0 0.0
      %1159 = vmatprep.subr.mxu0 0.0
      %1160 = vmatpush1.msra.mxu0 0.0
      %1161 = vmatprep.subr.mxu0 0.0
      %1162 = vmatpush1.msra.mxu0 0.0
      %1163 = vmatprep.subr.mxu0 0.0
      %1164 = vmatpush1.msra.mxu0 0.0
      %1165 = vmatprep.subr.mxu0 0.0
      %1166 = vmatpush1.msra.mxu0 0.0
      %1167 = vmatprep.subr.mxu0 0.0
      %1168 = vmatpush1.msra.mxu0 0.0
      %1169 = vmatprep.subr.mxu0 0.0
      %1170 = vmatpush1.msra.mxu0 0.0
      %1171 = vmatprep.subr.mxu0 0.0
      %1172 = vmatpush1.msra.mxu0 0.0
      %1173 = vmatprep.subr.mxu0 0.0
      %1174 = vmatpush1.msra.mxu0 0.0
      %1175 = vmatprep.mubr.f32.mxu0 0.0
      %1176 = vmatmul.mubr.f32.gmra.mrb[0].mxu0 %v955
      %v1177 = vpop.f32.mrb[0].mxu0
      %v1178 = vadd.f32 0.0, %v1177
      %v1179 = vpop.f32.mrb[0].mxu0
      %1180 = vmatprep.mubr.f32.mxu0 0.0
      %1181 = vmatmul.mubr.f32.gmra.mrb[0].mxu0 %v956
      %v1182 = vpop.f32.mrb[0].mxu0
      %v1183 = vadd.f32 0.0, %v1182
      %v1184 = vpop.f32.mrb[0].mxu0
      %1185 = vmatprep.mubr.f32.mxu0 0.0
      %1186 = vmatmul.mubr.f32.gmra.mrb[0].mxu0 %v957
      %v1187 = vpop.f32.mrb[0].mxu0
      %v1188 = vadd.f32 0.0, %v1187
      %v1189 = vpop.f32.mrb[0].mxu0
      %1190 = vmatprep.mubr.f32.mxu0 0.0
      %1191 = vmatmul.mubr.f32.gmra.mrb[0].mxu0 %v958
      %v1192 = vpop.f32.mrb[0].mxu0
      %v1193 = vadd.f32 0.0, %v1192
      %v1194 = vpop.f32.mrb[0].mxu0
      %1195 = vmatprep.mubr.f32.mxu0 0.0
      %1196 = vmatmul.mubr.f32.gmra.mrb[0].mxu0 %v959
      %v1197 = vpop.f32.mrb[0].mxu0
      %v1198 = vadd.f32 0.0, %v1197
      %v1199 = vpop.f32.mrb[0].mxu0
      %1200 = vmatprep.mubr.f32.mxu0 0.0
      %1201 = vmatmul.mubr.f32.gmra.mrb[0].mxu0 %v960
      %v1202 = vpop.f32.mrb[0].mxu0
      %v1203 = vadd.f32 0.0, %v1202
      %v1204 = vpop.f32.mrb[0].mxu0
      %1205 = vmatprep.mubr.f32.mxu0 0.0
      %1206 = vmatmul.mubr.f32.gmra.mrb[0].mxu0 %v961
      %v1207 = vpop.f32.mrb[0].mxu0
      %v1208 = vadd.f32 0.0, %v1207
      %v1209 = vpop.f32.mrb[0].mxu0
      %1210 = vmatprep.mubr.f32.mxu0 0.0
      %1211 = vmatmul.mubr.f32.gmra.mrb[0].mxu0 %v962
      %v1212 = vpop.f32.mrb[0].mxu0
      %v1213 = vadd.f32 0.0, %v1212
      %v1214 = vpop.f32.mrb[0].mxu0
      %1215 = vdwg.mxu0
      %v1216 = vadd.f32 %v1086, %v1178
      %v1217 = vadd.f32 %v1087, %v1183
      %v1218 = vadd.f32 %v1088, %v1188
      %v1219 = vadd.f32 %v1089, %v1193
      %v1220 = vadd.f32 %v1090, %v1198
      %v1221 = vadd.f32 %v1091, %v1203
      %v1222 = vadd.f32 %v1092, %v1208
      %v1223 = vadd.f32 %v1093, %v1213
      %s1224 = scalar_lea.vmem %s1, 1024
      %v1225 = vld [vmem:[%s1224] sm:$0xff]
      %v1226 = vld [vmem:[%s1224 + $0x8] sm:$0xff]
      %v1227 = vld [vmem:[%s1224 + $0x10] sm:$0xff]
      %v1228 = vld [vmem:[%s1224 + $0x18] sm:$0xff]
      %v1229 = vld [vmem:[%s1224 + $0x20] sm:$0xff]
      %v1230 = vld [vmem:[%s1224 + $0x28] sm:$0xff]
      %v1231 = vld [vmem:[%s1224 + $0x30] sm:$0xff]
      %v1232 = vld [vmem:[%s1224 + $0x38] sm:$0xff]
      %v1233 = vld [vmem:[%s1224 + $0x40] sm:$0xff]
      %v1234 = vld [vmem:[%s1224 + $0x48] sm:$0xff]
      %v1235 = vld [vmem:[%s1224 + $0x50] sm:$0xff]
      %v1236 = vld [vmem:[%s1224 + $0x58] sm:$0xff]
      %v1237 = vld [vmem:[%s1224 + $0x60] sm:$0xff]
      %v1238 = vld [vmem:[%s1224 + $0x68] sm:$0xff]
      %v1239 = vld [vmem:[%s1224 + $0x70] sm:$0xff]
      %v1240 = vld [vmem:[%s1224 + $0x78] sm:$0xff]
      %1241 = vmatprep.subr.mxu0 0.0
      %1242 = vmatpush1.msra.mxu0 %v1225
      %1243 = vmatprep.subr.mxu0 0.0
      %1244 = vmatpush1.msra.mxu0 %v1226
      %1245 = vmatprep.subr.mxu0 0.0
      %1246 = vmatpush1.msra.mxu0 %v1227
      %1247 = vmatprep.subr.mxu0 0.0
      %1248 = vmatpush1.msra.mxu0 %v1228
      %1249 = vmatprep.subr.mxu0 0.0
      %1250 = vmatpush1.msra.mxu0 %v1229
      %1251 = vmatprep.subr.mxu0 0.0
      %1252 = vmatpush1.msra.mxu0 %v1230
      %1253 = vmatprep.subr.mxu0 0.0
      %1254 = vmatpush1.msra.mxu0 %v1231
      %1255 = vmatprep.subr.mxu0 0.0
      %1256 = vmatpush1.msra.mxu0 %v1232
      %1257 = vmatprep.subr.mxu0 0.0
      %1258 = vmatpush1.msra.mxu0 %v1233
      %1259 = vmatprep.subr.mxu0 0.0
      %1260 = vmatpush1.msra.mxu0 %v1234
      %1261 = vmatprep.subr.mxu0 0.0
      %1262 = vmatpush1.msra.mxu0 %v1235
      %1263 = vmatprep.subr.mxu0 0.0
      %1264 = vmatpush1.msra.mxu0 %v1236
      %1265 = vmatprep.subr.mxu0 0.0
      %1266 = vmatpush1.msra.mxu0 %v1237
      %1267 = vmatprep.subr.mxu0 0.0
      %1268 = vmatpush1.msra.mxu0 %v1238
      %1269 = vmatprep.subr.mxu0 0.0
      %1270 = vmatpush1.msra.mxu0 %v1239
      %1271 = vmatprep.subr.mxu0 0.0
      %1272 = vmatpush1.msra.mxu0 %v1240
      %1273 = vmatprep.subr.mxu0 0.0
      %1274 = vmatpush1.msra.mxu0 0.0
      %1275 = vmatprep.subr.mxu0 0.0
      %1276 = vmatpush1.msra.mxu0 0.0
      %1277 = vmatprep.subr.mxu0 0.0
      %1278 = vmatpush1.msra.mxu0 0.0
      %1279 = vmatprep.subr.mxu0 0.0
      %1280 = vmatpush1.msra.mxu0 0.0
      %1281 = vmatprep.subr.mxu0 0.0
      %1282 = vmatpush1.msra.mxu0 0.0
      %1283 = vmatprep.subr.mxu0 0.0
      %1284 = vmatpush1.msra.mxu0 0.0
      %1285 = vmatprep.subr.mxu0 0.0
      %1286 = vmatpush1.msra.mxu0 0.0
      %1287 = vmatprep.subr.mxu0 0.0
      %1288 = vmatpush1.msra.mxu0 0.0
      %1289 = vmatprep.subr.mxu0 0.0
      %1290 = vmatpush1.msra.mxu0 0.0
      %1291 = vmatprep.subr.mxu0 0.0
      %1292 = vmatpush1.msra.mxu0 0.0
      %1293 = vmatprep.subr.mxu0 0.0
      %1294 = vmatpush1.msra.mxu0 0.0
      %1295 = vmatprep.subr.mxu0 0.0
      %1296 = vmatpush1.msra.mxu0 0.0
      %1297 = vmatprep.subr.mxu0 0.0
      %1298 = vmatpush1.msra.mxu0 0.0
      %1299 = vmatprep.subr.mxu0 0.0
      %1300 = vmatpush1.msra.mxu0 0.0
      %1301 = vmatprep.subr.mxu0 0.0
      %1302 = vmatpush1.msra.mxu0 0.0
      %1303 = vmatprep.subr.mxu0 0.0
      %1304 = vmatpush1.msra.mxu0 0.0
      %1305 = vmatprep.mubr.f32.mxu0 0.0
      %1306 = vmatmul.mubr.f32.gmra.mrb[0].mxu0 %v956
      %v1307 = vpop.f32.mrb[0].mxu0
      %v1308 = vadd.f32 0.0, %v1307
      %v1309 = vpop.f32.mrb[0].mxu0
      %1310 = vmatprep.mubr.f32.mxu0 0.0
      %1311 = vmatmul.mubr.f32.gmra.mrb[0].mxu0 %v957
      %v1312 = vpop.f32.mrb[0].mxu0
      %v1313 = vadd.f32 0.0, %v1312
      %v1314 = vpop.f32.mrb[0].mxu0
      %1315 = vmatprep.mubr.f32.mxu0 0.0
      %1316 = vmatmul.mubr.f32.gmra.mrb[0].mxu0 %v958
      %v1317 = vpop.f32.mrb[0].mxu0
      %v1318 = vadd.f32 0.0, %v1317
      %v1319 = vpop.f32.mrb[0].mxu0
      %1320 = vmatprep.mubr.f32.mxu0 0.0
      %1321 = vmatmul.mubr.f32.gmra.mrb[0].mxu0 %v959
      %v1322 = vpop.f32.mrb[0].mxu0
      %v1323 = vadd.f32 0.0, %v1322
      %v1324 = vpop.f32.mrb[0].mxu0
      %1325 = vmatprep.mubr.f32.mxu0 0.0
      %1326 = vmatmul.mubr.f32.gmra.mrb[0].mxu0 %v960
      %v1327 = vpop.f32.mrb[0].mxu0
      %v1328 = vadd.f32 0.0, %v1327
      %v1329 = vpop.f32.mrb[0].mxu0
      %1330 = vmatprep.mubr.f32.mxu0 0.0
      %1331 = vmatmul.mubr.f32.gmra.mrb[0].mxu0 %v961
      %v1332 = vpop.f32.mrb[0].mxu0
      %v1333 = vadd.f32 0.0, %v1332
      %v1334 = vpop.f32.mrb[0].mxu0
      %1335 = vmatprep.mubr.f32.mxu0 0.0
      %1336 = vmatmul.mubr.f32.gmra.mrb[0].mxu0 %v962
      %v1337 = vpop.f32.mrb[0].mxu0
      %v1338 = vadd.f32 0.0, %v1337
      %v1339 = vpop.f32.mrb[0].mxu0
      %1340 = vmatprep.mubr.f32.mxu0 0.0
      %1341 = vmatmul.mubr.f32.gmra.mrb[0].mxu0 %v963
      %v1342 = vpop.f32.mrb[0].mxu0
      %v1343 = vadd.f32 0.0, %v1342
      %v1344 = vpop.f32.mrb[0].mxu0
      %1345 = vdwg.mxu0
      %v1346 = vadd.f32 %v1216, %v1308
      %v1347 = vadd.f32 %v1217, %v1313
      %v1348 = vadd.f32 %v1218, %v1318
      %v1349 = vadd.f32 %v1219, %v1323
      %v1350 = vadd.f32 %v1220, %v1328
      %v1351 = vadd.f32 %v1221, %v1333
      %v1352 = vadd.f32 %v1222, %v1338
      %v1353 = vadd.f32 %v1223, %v1343
      %v1354 = vld [vmem:[%s2] sm:$0x1]
      %v1356 = vlaneseq
      %v1357 = vshrl.u32 %v1356, 7
      %v1358 = vsub.s32 0, %v1357
      %v1359 = vrot.slane %v1354, %v1358
      %v1361 = vadd.f32 %v1346, %v1359
      %v1362 = vadd.f32 %v1347, %v1359
      %v1363 = vadd.f32 %v1348, %v1359
      %v1364 = vadd.f32 %v1349, %v1359
      %v1365 = vadd.f32 %v1350, %v1359
      %v1366 = vadd.f32 %v1351, %v1359
      %v1367 = vadd.f32 %v1352, %v1359
      %v1368 = vadd.f32 %v1353, %v1359
      %v1369 = vmax.f32 %v1361, 0.0
      %v1370 = vmax.f32 %v1362, 0.0
      %v1371 = vmax.f32 %v1363, 0.0
      %v1372 = vmax.f32 %v1364, 0.0
      %v1373 = vmax.f32 %v1365, 0.0
      %v1374 = vmax.f32 %v1366, 0.0
      %v1375 = vmax.f32 %v1367, 0.0
      %v1376 = vmax.f32 %v1368, 0.0
      %1377 = vst [vmem:[%s170] sm:$0xff] %v1369
      %1378 = vst [vmem:[%s170 + $0x8] sm:$0xff] %v1370
      %1379 = vst [vmem:[%s170 + $0x10] sm:$0xff] %v1371
      %1380 = vst [vmem:[%s170 + $0x18] sm:$0xff] %v1372
      %1381 = vst [vmem:[%s170 + $0x20] sm:$0xff] %v1373
      %1382 = vst [vmem:[%s170 + $0x28] sm:$0xff] %v1374
      %1383 = vst [vmem:[%s170 + $0x30] sm:$0xff] %v1375
      %1384 = vst [vmem:[%s170 + $0x38] sm:$0xff] %v1376
      %p1385 = scmp.lt.s32.totalorder %s14, 1
      %s1386 = scalar_select %p1385, %s14, 1
      %s1387 = smul.addr %s1386, 8
      %s1388 = smul.addr %s1387, 8
      %s1389 = scalar_lea.vmem %s3, %s1388
      // Predicated region
      $region33: #{_lambda_.4} parent=31 // pred_check
        %p1390 = pneg %p100
      $region34: #{_lambda_.4} parent=31 // pred_check_branch
        %1392 = sbr.rel (%p1390) target = $region36
      $region35: #{_lambda_.4} parent=31 // pred_region
        _
      $region36: #{_lambda_.4} parent=31 // pred_fallthru
        _
    $region32: #{_lambda_.4} parent=5 // pred_fallthru
      _
    %p1393 = scmp.le.s32.totalorder 2, %s9
    // Predicated region
    $region37: #{_lambda_.4} parent=5 // pred_check
      %p1394 = pneg %p1393
    $region38: #{_lambda_.4} parent=5 // pred_check_branch
      %1396 = sbr.rel (%p1394) target = $region40
    $region39: #{_lambda_.4} parent=5 // pred_region
      %s1397 = ssub.s32 %s9, 2
      // Predicated region
      $region41: #{_lambda_.4} parent=39 // pred_check
        %p1398 = pneg %p106
      $region42: #{_lambda_.4} parent=39 // pred_check_branch
        %1400 = sbr.rel (%p1398) target = $region44
      $region43: #{_lambda_.4} parent=39 // pred_region
        %p1401 = scmp.lt.s32.totalorder %s15, 1
        %s1402 = scalar_select %p1401, %s15, 1
        %s1403 = smul.addr %s1402, 8
        %s1404 = smul.addr %s1403, 8
        %s1405 = scalar_lea.vmem %s3, %s1404
      $region44: #{_lambda_.4} parent=39 // pred_fallthru
        _
    $region40: #{_lambda_.4} parent=5 // pred_fallthru
      _
  $region6: #{_lambda_.4} parent=0 // loop_footer
    %s13 = sadd.s32 1, %s9
  $region7: #{_lambda_.4} parent=0 // loop_footer_branch
    %8 = sbr.rel target = $region3
  $region8: #{_lambda_.4} parent=0 // loop_exit
    _

</llo_original>
